<compile_context>
chip_gen: v7x
topology: tpu7x:2x2x1
jax: 0.10.0
libtpu: 0.0.40
codegen_flags: <defaults>
</compile_context>

<pallas_src>
import jax
import jax.numpy as jnp
from jax.experimental import pallas as pl
from jax.experimental.pallas import tpu as pltpu

IN_FEATURES = 28 * 28      # 784
K_PAD = 896                # 7 * 128, lane-dense K for the first matmul
HIDDEN = 512
OUT_FEATURES = 10
OUT_PAD = 128              # lane-dense output slab; slice [:, :10] in the wrapper
MAX_TB = 512               # batch tile (MXU row dim) for large batches


def _round_up(x, m):
    return (x + m - 1) // m * m


def _cdiv(a, b):
    return (a + b - 1) // b


def _choose_tiling(batch):
    """Return (TB, n_tiles). Megacore-aware: >= 2 tiles once batch is large."""
    b16 = _round_up(batch, 16)              # bf16 sublane packing
    if b16 <= MAX_TB:
        # Small/medium batch: single tile. Splitting a weight-DMA-bound
        # problem across cores would just duplicate the resident-weight DMA.
        return b16, 1
    # Large batch: cap tile at MAX_TB but keep >= 2 grid steps so v7x megacore
    # can shard tiles across both TensorCores ("parallel" axis).
    n_tiles = max(2, _cdiv(b16, MAX_TB))
    tb = _round_up(_cdiv(b16, n_tiles), 16)
    return tb, n_tiles


def mlp_kernel(x_ref, w1_ref, b1_ref, w2_ref, b2_ref, w3_ref, b3_ref, o_ref):
    # x_ref:  (TB, 896)  bf16     w1_ref: (896, 512) bf16   b1_ref: (1, 512) f32
    # w2_ref: (512, 512) bf16     b2_ref: (1, 512) f32
    # w3_ref: (512, 128) bf16     b3_ref: (1, 128) f32
    # o_ref:  (TB, 128)  f32
    x = x_ref[...]

    h1 = jnp.dot(x, w1_ref[...], preferred_element_type=jnp.float32) + b1_ref[...]
    h1 = jnp.maximum(h1, 0.0).astype(jnp.bfloat16)

    h2 = jnp.dot(h1, w2_ref[...], preferred_element_type=jnp.float32) + b2_ref[...]
    h2 = jnp.maximum(h2, 0.0).astype(jnp.bfloat16)

    logits = jnp.dot(h2, w3_ref[...], preferred_element_type=jnp.float32) + b3_ref[...]
    o_ref[...] = logits.astype(o_ref.dtype)


def prepare_params(params):
    """One-time weight prep: pad + cast to the kernel's bf16 layout.

    Call this ONCE (outside the per-step forward path) and reuse the result.
    """
    w1, b1, w2, b2, w3, b3 = params     # weights (in, out) f32, biases (1, out) f32
    w1_p = jnp.pad(w1, ((0, K_PAD - IN_FEATURES), (0, 0))).astype(jnp.bfloat16)
    w2_p = w2.astype(jnp.bfloat16)
    w3_p = jnp.pad(w3, ((0, 0), (0, OUT_PAD - OUT_FEATURES))).astype(jnp.bfloat16)
    b1_p = b1.reshape(1, HIDDEN).astype(jnp.float32)
    b2_p = b2.reshape(1, HIDDEN).astype(jnp.float32)
    b3_p = jnp.pad(b3.reshape(1, OUT_FEATURES),
                   ((0, 0), (0, OUT_PAD - OUT_FEATURES))).astype(jnp.float32)
    return (w1_p, b1_p, w2_p, b2_p, w3_p, b3_p)


def neural_network_forward(x, prepared_params):
    """x: (B, 1, 28, 28) or (B, 28, 28) float -> logits (B, 10) float32.

    `prepared_params` must come from `prepare_params` (padded bf16 weights).
    """
    w1_p, b1_p, w2_p, b2_p, w3_p, b3_p = prepared_params
    B = x.shape[0]

    # nn.Flatten(): flatten all dims after batch.
    x_flat = x.reshape(B, -1)
    assert x_flat.shape[1] == IN_FEATURES

    TB, n_tiles = _choose_tiling(B)
    B_pad = TB * n_tiles

    # Single fused pad of the bf16-cast flattened input (zero rows/cols are
    # mathematically inert and sliced away below).
    x_p = jnp.pad(x_flat.astype(jnp.bfloat16),
                  ((0, B_pad - B), (0, K_PAD - IN_FEATURES)))

    grid = (n_tiles,)

    weight_bytes = 2 * (w1_p.size + w2_p.size + w3_p.size)
    cost = pl.CostEstimate(
        flops=2 * B_pad * (K_PAD * HIDDEN + HIDDEN * HIDDEN + HIDDEN * OUT_PAD),
        transcendentals=0,
        bytes_accessed=(2 * x_p.size + weight_bytes
                        + 4 * (b1_p.size + b2_p.size + b3_p.size)
                        + 4 * B_pad * OUT_PAD),
    )

    out = pl.pallas_call(
        mlp_kernel,
        out_shape=jax.ShapeDtypeStruct((B_pad, OUT_PAD), jnp.float32),
        grid=grid,
        in_specs=[
            pl.BlockSpec((TB, K_PAD), lambda i: (i, 0)),          # x tile streams
            pl.BlockSpec((K_PAD, HIDDEN), lambda i: (0, 0)),      # weights resident
            pl.BlockSpec((1, HIDDEN), lambda i: (0, 0)),
            pl.BlockSpec((HIDDEN, HIDDEN), lambda i: (0, 0)),
            pl.BlockSpec((1, HIDDEN), lambda i: (0, 0)),
            pl.BlockSpec((HIDDEN, OUT_PAD), lambda i: (0, 0)),
            pl.BlockSpec((1, OUT_PAD), lambda i: (0, 0)),
        ],
        out_specs=pl.BlockSpec((TB, OUT_PAD), lambda i: (i, 0)),
        compiler_params=pltpu.CompilerParams(
            dimension_semantics=("parallel",),
        ),
        cost_estimate=cost,
    )(x_p, w1_p, b1_p, w2_p, b2_p, w3_p, b3_p)

    return out[:B, :OUT_FEATURES]


def init_params(key):
    """Deterministic init mimicking PyTorch nn.Linear default (uniform +-1/sqrt(fan_in))."""
    def linear(key, fan_in, fan_out):
        kw, kb = jax.random.split(key)
        bound = 1.0 / jnp.sqrt(fan_in)
        # stored as (in, out) so the kernel computes x @ W (== PyTorch x @ W.T)
        w = jax.random.uniform(kw, (fan_in, fan_out), jnp.float32, -bound, bound)
        b = jax.random.uniform(kb, (1, fan_out), jnp.float32, -bound, bound)
        return w, b

    k1, k2, k3 = jax.random.split(key, 3)
    w1, b1 = linear(k1, IN_FEATURES, HIDDEN)
    w2, b2 = linear(k2, HIDDEN, HIDDEN)
    w3, b3 = linear(k3, HIDDEN, OUT_FEATURES)
    return (w1, b1, w2, b2, w3, b3)


def reference_forward(x, params):
    """Pure-JAX f32 reference for correctness checking."""
    w1, b1, w2, b2, w3, b3 = params
    x_flat = x.reshape(x.shape[0], -1).astype(jnp.float32)
    h1 = jnp.maximum(x_flat @ w1 + b1, 0.0)
    h2 = jnp.maximum(h1 @ w2 + b2, 0.0)
    return h2 @ w3 + b3


if __name__ == "__main__":
    key = jax.random.PRNGKey(0)
    k_params, k_x = jax.random.split(key)

    params = init_params(k_params)

    # Hoisted, one-time weight prep (padded bf16 layout for the kernel).
    prepared = jax.tree_util.tree_map(jax.block_until_ready,
                                      prepare_params(params))

    forward = jax.jit(neural_network_forward)

    # MNIST-like NCHW input, small batch.
    x = jax.random.normal(k_x, (2, 1, 28, 28), jnp.float32)

    logits = forward(x, prepared)
    logits = jax.block_until_ready(logits)

    ref = reference_forward(x, params)
    assert logits.shape == (2, OUT_FEATURES), logits.shape
    # bf16 weights/activations (f32 accumulation) -> looser tolerance vs f32 reference.
    assert jnp.allclose(logits, ref, atol=2e-2, rtol=2e-2), "mismatch vs reference"

    print("KERNEL_OK")
</pallas_src>

<mosaic_0001>
module attributes {stable_mosaic.version = 11 : i64} {
  func.func @mlp_kernel(%arg0: i32, %arg1: memref<16x896xbf16, #tpu.memory_space<vmem>>, %arg2: memref<896x512xbf16, #tpu.memory_space<vmem>>, %arg3: memref<1x512xf32, #tpu.memory_space<vmem>>, %arg4: memref<512x512xbf16, #tpu.memory_space<vmem>>, %arg5: memref<1x512xf32, #tpu.memory_space<vmem>>, %arg6: memref<512x128xbf16, #tpu.memory_space<vmem>>, %arg7: memref<1x128xf32, #tpu.memory_space<vmem>>, %arg8: memref<16x128xf32, #tpu.memory_space<vmem>>) attributes {dimension_semantics = [#tpu.dimension_semantics<parallel>], iteration_bounds = array<i64: 1>, scalar_prefetch = 0 : i64, scratch_operands = 0 : i64, tpu.core_type = #tpu.core_type<tc>, window_params = [{transform_indices = @transform_0, window_bounds = array<i64: 16, 896>}, {pipeline_mode = #tpu.pipeline_mode<synchronous>, transform_indices = @transform_1, window_bounds = array<i64: 896, 512>}, {pipeline_mode = #tpu.pipeline_mode<synchronous>, transform_indices = @transform_2, window_bounds = array<i64: 1, 512>}, {pipeline_mode = #tpu.pipeline_mode<synchronous>, transform_indices = @transform_3, window_bounds = array<i64: 512, 512>}, {pipeline_mode = #tpu.pipeline_mode<synchronous>, transform_indices = @transform_4, window_bounds = array<i64: 1, 512>}, {pipeline_mode = #tpu.pipeline_mode<synchronous>, transform_indices = @transform_5, window_bounds = array<i64: 512, 128>}, {pipeline_mode = #tpu.pipeline_mode<synchronous>, transform_indices = @transform_6, window_bounds = array<i64: 1, 128>}, {transform_indices = @transform_7, window_bounds = array<i64: 16, 128>}]} {
    %c0 = arith.constant 0 : index
    %c0_0 = arith.constant 0 : index
    %0 = vector.load %arg1[%c0, %c0_0] : memref<16x896xbf16, #tpu.memory_space<vmem>>, vector<16x896xbf16>
    %c0_1 = arith.constant 0 : index
    %c0_2 = arith.constant 0 : index
    %1 = vector.load %arg2[%c0_1, %c0_2] : memref<896x512xbf16, #tpu.memory_space<vmem>>, vector<896x512xbf16>
    %cst = arith.constant dense<0.000000e+00> : vector<16x512xf32>
    %2 = tpu.matmul %0, %1, %cst {dimension_numbers = #tpu.dot_dimension_numbers<[1], [0], [0], [1], [0, 0, 1, 1], [], []>} : vector<16x896xbf16>, vector<896x512xbf16>, vector<16x512xf32> -> vector<16x512xf32>
    %c0_3 = arith.constant 0 : index
    %c0_4 = arith.constant 0 : index
    %3 = vector.load %arg3[%c0_3, %c0_4] : memref<1x512xf32, #tpu.memory_space<vmem>>, vector<1x512xf32>
    %4 = vector.broadcast %3 : vector<1x512xf32> to vector<16x512xf32>
    %5 = arith.addf %2, %4 : vector<16x512xf32>
    %cst_5 = arith.constant 0.000000e+00 : f32
    %6 = vector.broadcast %cst_5 : f32 to vector<16x512xf32>
    %7 = arith.maximumf %5, %6 : vector<16x512xf32>
    %8 = arith.truncf %7 : vector<16x512xf32> to vector<16x512xbf16>
    %c0_6 = arith.constant 0 : index
    %c0_7 = arith.constant 0 : index
    %9 = vector.load %arg4[%c0_6, %c0_7] : memref<512x512xbf16, #tpu.memory_space<vmem>>, vector<512x512xbf16>
    %cst_8 = arith.constant dense<0.000000e+00> : vector<16x512xf32>
    %10 = tpu.matmul %8, %9, %cst_8 {dimension_numbers = #tpu.dot_dimension_numbers<[1], [0], [0], [1], [0, 0, 1, 1], [], []>} : vector<16x512xbf16>, vector<512x512xbf16>, vector<16x512xf32> -> vector<16x512xf32>
    %c0_9 = arith.constant 0 : index
    %c0_10 = arith.constant 0 : index
    %11 = vector.load %arg5[%c0_9, %c0_10] : memref<1x512xf32, #tpu.memory_space<vmem>>, vector<1x512xf32>
    %12 = vector.broadcast %11 : vector<1x512xf32> to vector<16x512xf32>
    %13 = arith.addf %10, %12 : vector<16x512xf32>
    %cst_11 = arith.constant 0.000000e+00 : f32
    %14 = vector.broadcast %cst_11 : f32 to vector<16x512xf32>
    %15 = arith.maximumf %13, %14 : vector<16x512xf32>
    %16 = arith.truncf %15 : vector<16x512xf32> to vector<16x512xbf16>
    %c0_12 = arith.constant 0 : index
    %c0_13 = arith.constant 0 : index
    %17 = vector.load %arg6[%c0_12, %c0_13] : memref<512x128xbf16, #tpu.memory_space<vmem>>, vector<512x128xbf16>
    %cst_14 = arith.constant dense<0.000000e+00> : vector<16x128xf32>
    %18 = tpu.matmul %16, %17, %cst_14 {dimension_numbers = #tpu.dot_dimension_numbers<[1], [0], [0], [1], [0, 0, 1, 1], [], []>} : vector<16x512xbf16>, vector<512x128xbf16>, vector<16x128xf32> -> vector<16x128xf32>
    %c0_15 = arith.constant 0 : index
    %c0_16 = arith.constant 0 : index
    %19 = vector.load %arg7[%c0_15, %c0_16] : memref<1x128xf32, #tpu.memory_space<vmem>>, vector<1x128xf32>
    %20 = vector.broadcast %19 : vector<1x128xf32> to vector<16x128xf32>
    %21 = arith.addf %18, %20 : vector<16x128xf32>
    %c0_17 = arith.constant 0 : index
    %c0_18 = arith.constant 0 : index
    %22 = vector.load %arg8[%c0_17, %c0_18] : memref<16x128xf32, #tpu.memory_space<vmem>>, vector<16x128xf32>
    tpu.vector_store %arg8[%c0_17, %c0_18], %21 {strides = array<i32>} : memref<16x128xf32, #tpu.memory_space<vmem>>, vector<16x128xf32>,
    return
  }
  func.func @transform_0(%arg0: i32) -> (i32, i32) {
    %c0_i32 = arith.constant 0 : i32
    %c0_i32_0 = arith.constant 0 : i32
    return %arg0, %c0_i32 : i32, i32
  }
  func.func @transform_1(%arg0: i32) -> (i32, i32) {
    %c0_i32 = arith.constant 0 : i32
    %c0_i32_0 = arith.constant 0 : i32
    %c0_i32_1 = arith.constant 0 : i32
    return %c0_i32, %c0_i32_0 : i32, i32
  }
  func.func @transform_2(%arg0: i32) -> (i32, i32) {
    %c0_i32 = arith.constant 0 : i32
    %c0_i32_0 = arith.constant 0 : i32
    %c0_i32_1 = arith.constant 0 : i32
    return %c0_i32, %c0_i32_0 : i32, i32
  }
  func.func @transform_3(%arg0: i32) -> (i32, i32) {
    %c0_i32 = arith.constant 0 : i32
    %c0_i32_0 = arith.constant 0 : i32
    %c0_i32_1 = arith.constant 0 : i32
    return %c0_i32, %c0_i32_0 : i32, i32
  }
  func.func @transform_4(%arg0: i32) -> (i32, i32) {
    %c0_i32 = arith.constant 0 : i32
    %c0_i32_0 = arith.constant 0 : i32
    %c0_i32_1 = arith.constant 0 : i32
    return %c0_i32, %c0_i32_0 : i32, i32
  }
  func.func @transform_5(%arg0: i32) -> (i32, i32) {
    %c0_i32 = arith.constant 0 : i32
    %c0_i32_0 = arith.constant 0 : i32
    %c0_i32_1 = arith.constant 0 : i32
    return %c0_i32, %c0_i32_0 : i32, i32
  }
  func.func @transform_6(%arg0: i32) -> (i32, i32) {
    %c0_i32 = arith.constant 0 : i32
    %c0_i32_0 = arith.constant 0 : i32
    %c0_i32_1 = arith.constant 0 : i32
    return %c0_i32, %c0_i32_0 : i32, i32
  }
  func.func @transform_7(%arg0: i32) -> (i32, i32) {
    %c0_i32 = arith.constant 0 : i32
    %c0_i32_0 = arith.constant 0 : i32
    return %arg0, %c0_i32 : i32, i32
  }
}

</mosaic_0001>

<llo_original>
// kernel: neural_network_forward.1
$region0: #{neural_network_forward.1}
  #allocation0 [shape = 'u32[]', space=smem, size = 0x4, offset = 0x4, fixed_abs, tag = 'smem constant byte address 0x4 - core index']
  #allocation1 [shape = 'u32[144,128]{1,0:T(1,128)}', space=vmem, size = 0x12000, scoped, tag = 'internal scratch']
  %s0 = inlined_call_operand.vmem [shape: bf16[16,896], index: 0, kind: input, shape index: {}]
  %s1 = inlined_call_operand.hbm [shape: bf16[896,512], index: 1, kind: input, shape index: {}]
  %s2 = inlined_call_operand.vmem [shape: f32[1,512], index: 2, kind: input, shape index: {}]
  %s3 = inlined_call_operand.hbm [shape: bf16[512,512], index: 3, kind: input, shape index: {}]
  %s4 = inlined_call_operand.vmem [shape: f32[1,512], index: 4, kind: input, shape index: {}]
  %s5 = inlined_call_operand.hbm [shape: bf16[512,128], index: 5, kind: input, shape index: {}]
  %s6 = inlined_call_operand.vmem [shape: f32[1,128], index: 6, kind: input, shape index: {}]
  %s7 = inlined_call_operand.vmem [shape: f32[16,128], index: 7, kind: output, shape index: {}]
  %s8 = sld [smem:[#allocation0]]
  $region50: #{neural_network_forward.1} parent=0
    _
  %s10 = ssub.s32 1, %s8
  %s11 = scalar_select 0, %s10, %s8
  $region1: #{neural_network_forward.1} parent=0
    #allocation2 [shape = 'u8[917504]{0}', space=vmem, size = 0xe0000, scoped, tag = 'input window, operand 1, single buffered']
    #allocation3 [shape = 's32[1]{0}', space=sflag, size = 0x4, scoped, tag = 'scoped memory for neural_network_forward.1']
    #allocation4 [shape = 'u8[524288]{0}', space=vmem, size = 0x80000, scoped, tag = 'input window, operand 3, single buffered']
    #allocation5 [shape = 's32[1]{0}', space=sflag, size = 0x4, scoped, tag = 'scoped memory for neural_network_forward.1']
    #allocation6 [shape = 'u8[131072]{0}', space=vmem, size = 0x20000, scoped, tag = 'input window, operand 5, single buffered']
    %12 = vsyncpa [#allocation3], 0
    %13 = vsyncpa [#allocation5], 0
    // Predicated region
    $region2: #{neural_network_forward.1} parent=1 // pred_check
      _
    $region3: #{neural_network_forward.1} parent=1 // pred_check_branch
      %15 = sbr.rel (0) target = $region5
    $region4: #{neural_network_forward.1} parent=1 // pred_region
      _
    $region5: #{neural_network_forward.1} parent=1 // pred_fallthru
      _
    // Predicated region
    $region6: #{neural_network_forward.1} parent=1 // pred_check
      _
    $region7: #{neural_network_forward.1} parent=1 // pred_check_branch
      %17 = sbr.rel (0) target = $region9
    $region8: #{neural_network_forward.1} parent=1 // pred_region
      %s19 = ssub.s32 28672, 28672
      %20 = vsyncadd [#allocation3], %s19
      %s21 = sshll.u32 [#allocation2], 4
      %s22 = int_to_ptr.vmem [resolvable:$true] %s21
      %27 = dma.hbm_to_vmem [thread:$0]  %s1, 28672, %s22, [#allocation3], 256, 256, 16
    $region9: #{neural_network_forward.1} parent=1 // pred_fallthru
      _
    // Predicated region
    $region10: #{neural_network_forward.1} parent=1 // pred_check
      _
    $region11: #{neural_network_forward.1} parent=1 // pred_check_branch
      %29 = sbr.rel (0) target = $region13
    $region12: #{neural_network_forward.1} parent=1 // pred_region
      _
    $region13: #{neural_network_forward.1} parent=1 // pred_fallthru
      _
    // Predicated region
    $region14: #{neural_network_forward.1} parent=1 // pred_check
      _
    $region15: #{neural_network_forward.1} parent=1 // pred_check_branch
      %31 = sbr.rel (0) target = $region17
    $region16: #{neural_network_forward.1} parent=1 // pred_region
      %s33 = ssub.s32 16384, 16384
      %34 = vsyncadd [#allocation5], %s33
      %s35 = sshll.u32 [#allocation4], 4
      %s36 = int_to_ptr.vmem [resolvable:$true] %s35
      %41 = dma.hbm_to_vmem [thread:$0]  %s3, 16384, %s36, [#allocation5], 256, 256, 16
    $region17: #{neural_network_forward.1} parent=1 // pred_fallthru
      _
    // Predicated region
    $region18: #{neural_network_forward.1} parent=1 // pred_check
      _
    $region19: #{neural_network_forward.1} parent=1 // pred_check_branch
      %43 = sbr.rel (0) target = $region21
    $region20: #{neural_network_forward.1} parent=1 // pred_region
      _
    $region21: #{neural_network_forward.1} parent=1 // pred_fallthru
      _
    // Predicated region
    $region22: #{neural_network_forward.1} parent=1 // pred_check
      _
    $region23: #{neural_network_forward.1} parent=1 // pred_check_branch
      %45 = sbr.rel (0) target = $region25
    $region24: #{neural_network_forward.1} parent=1 // pred_region
      %s47 = ssub.s32 4096, 4096
      %48 = vsyncadd [#allocation5], %s47
      %s49 = sshll.u32 [#allocation6], 4
      %s50 = int_to_ptr.vmem [resolvable:$true] %s49
      %55 = dma.hbm_to_vmem [thread:$0]  %s5, 4096, %s50, [#allocation5], 64, 64, 4
    $region25: #{neural_network_forward.1} parent=1 // pred_fallthru
      _
    // Predicated region
    $region26: #{neural_network_forward.1} parent=1 // pred_check
      _
    $region27: #{neural_network_forward.1} parent=1 // pred_check_branch
      %57 = sbr.rel (0) target = $region29
    $region28: #{neural_network_forward.1} parent=1 // pred_region
      _
    $region29: #{neural_network_forward.1} parent=1 // pred_fallthru
      _
    // Predicated region
    $region30: #{neural_network_forward.1} parent=1 // pred_check
      _
    $region31: #{neural_network_forward.1} parent=1 // pred_check_branch
      %59 = sbr.rel (0) target = $region33
    $region32: #{neural_network_forward.1} parent=1 // pred_region
      %60 = dma.done [#allocation3], 28672
    $region33: #{neural_network_forward.1} parent=1 // pred_fallthru
      _
    // Predicated region
    $region34: #{neural_network_forward.1} parent=1 // pred_check
      _
    $region35: #{neural_network_forward.1} parent=1 // pred_check_branch
      %62 = sbr.rel (0) target = $region37
    $region36: #{neural_network_forward.1} parent=1 // pred_region
      %63 = dma.done [#allocation5], 16384
    $region37: #{neural_network_forward.1} parent=1 // pred_fallthru
      _
    // Predicated region
    $region38: #{neural_network_forward.1} parent=1 // pred_check
      _
    $region39: #{neural_network_forward.1} parent=1 // pred_check_branch
      %65 = sbr.rel (0) target = $region41
    $region40: #{neural_network_forward.1} parent=1 // pred_region
      %66 = dma.done [#allocation5], 4096
    $region41: #{neural_network_forward.1} parent=1 // pred_fallthru
      _
    %v68 = vld [vmem:[%s0] sm:$0xff]
    %v69 = vld [vmem:[%s0 + $0x8] sm:$0xff]
    %v70 = vld [vmem:[%s0 + $0x10] sm:$0xff]
    %v71 = vld [vmem:[%s0 + $0x18] sm:$0xf]
    %v72 = vld [vmem:[%s0 + $0x1c] sm:$0xff]
    %v73 = vld [vmem:[%s0 + $0x24] sm:$0xff]
    %v74 = vld [vmem:[%s0 + $0x2c] sm:$0xff]
    %v75 = vld [vmem:[%s0 + $0x34] sm:$0xf]
    %v76 = vld [vmem:[#allocation2] sm:$0xff]
    %v77 = vld [vmem:[#allocation2 + $0x8] sm:$0xff]
    %v78 = vld [vmem:[#allocation2 + $0x10] sm:$0xff]
    %v79 = vld [vmem:[#allocation2 + $0x18] sm:$0xff]
    %v80 = vld [vmem:[#allocation2 + $0x20] sm:$0xff]
    %v81 = vld [vmem:[#allocation2 + $0x28] sm:$0xff]
    %v82 = vld [vmem:[#allocation2 + $0x30] sm:$0xff]
    %v83 = vld [vmem:[#allocation2 + $0x38] sm:$0xff]
    %v84 = vld [vmem:[#allocation2 + $0x40] sm:$0xff]
    %v85 = vld [vmem:[#allocation2 + $0x48] sm:$0xff]
    %v86 = vld [vmem:[#allocation2 + $0x50] sm:$0xff]
    %v87 = vld [vmem:[#allocation2 + $0x58] sm:$0xff]
    %v88 = vld [vmem:[#allocation2 + $0x60] sm:$0xff]
    %v89 = vld [vmem:[#allocation2 + $0x68] sm:$0xff]
    %v90 = vld [vmem:[#allocation2 + $0x70] sm:$0xff]
    %v91 = vld [vmem:[#allocation2 + $0x78] sm:$0xff]
    %v92 = vld [vmem:[#allocation2 + $0x80] sm:$0xff]
    %v93 = vld [vmem:[#allocation2 + $0x88] sm:$0xff]
    %v94 = vld [vmem:[#allocation2 + $0x90] sm:$0xff]
    %v95 = vld [vmem:[#allocation2 + $0x98] sm:$0xff]
    %v96 = vld [vmem:[#allocation2 + $0xa0] sm:$0xff]
    %v97 = vld [vmem:[#allocation2 + $0xa8] sm:$0xff]
    %v98 = vld [vmem:[#allocation2 + $0xb0] sm:$0xff]
    %v99 = vld [vmem:[#allocation2 + $0xb8] sm:$0xff]
    %v100 = vld [vmem:[#allocation2 + $0xc0] sm:$0xff]
    %v101 = vld [vmem:[#allocation2 + $0xc8] sm:$0xff]
    %v102 = vld [vmem:[#allocation2 + $0xd0] sm:$0xff]
    %v103 = vld [vmem:[#allocation2 + $0xd8] sm:$0xff]
    %v104 = vld [vmem:[#allocation2 + $0xe0] sm:$0xff]
    %v105 = vld [vmem:[#allocation2 + $0xe8] sm:$0xff]
    %v106 = vld [vmem:[#allocation2 + $0xf0] sm:$0xff]
    %v107 = vld [vmem:[#allocation2 + $0xf8] sm:$0xff]
    %v108 = vld [vmem:[#allocation2 + $0x100] sm:$0xff]
    %v109 = vld [vmem:[#allocation2 + $0x108] sm:$0xff]
    %v110 = vld [vmem:[#allocation2 + $0x110] sm:$0xff]
    %v111 = vld [vmem:[#allocation2 + $0x118] sm:$0xff]
    %v112 = vld [vmem:[#allocation2 + $0x120] sm:$0xff]
    %v113 = vld [vmem:[#allocation2 + $0x128] sm:$0xff]
    %v114 = vld [vmem:[#allocation2 + $0x130] sm:$0xff]
    %v115 = vld [vmem:[#allocation2 + $0x138] sm:$0xff]
    %v116 = vld [vmem:[#allocation2 + $0x140] sm:$0xff]
    %v117 = vld [vmem:[#allocation2 + $0x148] sm:$0xff]
    %v118 = vld [vmem:[#allocation2 + $0x150] sm:$0xff]
    %v119 = vld [vmem:[#allocation2 + $0x158] sm:$0xff]
    %v120 = vld [vmem:[#allocation2 + $0x160] sm:$0xff]
    %v121 = vld [vmem:[#allocation2 + $0x168] sm:$0xff]
    %v122 = vld [vmem:[#allocation2 + $0x170] sm:$0xff]
    %v123 = vld [vmem:[#allocation2 + $0x178] sm:$0xff]
    %v124 = vld [vmem:[#allocation2 + $0x180] sm:$0xff]
    %v125 = vld [vmem:[#allocation2 + $0x188] sm:$0xff]
    %v126 = vld [vmem:[#allocation2 + $0x190] sm:$0xff]
    %v127 = vld [vmem:[#allocation2 + $0x198] sm:$0xff]
    %v128 = vld [vmem:[#allocation2 + $0x1a0] sm:$0xff]
    %v129 = vld [vmem:[#allocation2 + $0x1a8] sm:$0xff]
    %v130 = vld [vmem:[#allocation2 + $0x1b0] sm:$0xff]
    %v131 = vld [vmem:[#allocation2 + $0x1b8] sm:$0xff]
    %v132 = vld [vmem:[#allocation2 + $0x1c0] sm:$0xff]
    %v133 = vld [vmem:[#allocation2 + $0x1c8] sm:$0xff]
    %v134 = vld [vmem:[#allocation2 + $0x1d0] sm:$0xff]
    %v135 = vld [vmem:[#allocation2 + $0x1d8] sm:$0xff]
    %v136 = vld [vmem:[#allocation2 + $0x1e0] sm:$0xff]
    %v137 = vld [vmem:[#allocation2 + $0x1e8] sm:$0xff]
    %v138 = vld [vmem:[#allocation2 + $0x1f0] sm:$0xff]
    %v139 = vld [vmem:[#allocation2 + $0x1f8] sm:$0xff]
    %v140 = vld [vmem:[#allocation2 + $0x200] sm:$0xff]
    %v141 = vld [vmem:[#allocation2 + $0x208] sm:$0xff]
    %v142 = vld [vmem:[#allocation2 + $0x210] sm:$0xff]
    %v143 = vld [vmem:[#allocation2 + $0x218] sm:$0xff]
    %v144 = vld [vmem:[#allocation2 + $0x220] sm:$0xff]
    %v145 = vld [vmem:[#allocation2 + $0x228] sm:$0xff]
    %v146 = vld [vmem:[#allocation2 + $0x230] sm:$0xff]
    %v147 = vld [vmem:[#allocation2 + $0x238] sm:$0xff]
    %v148 = vld [vmem:[#allocation2 + $0x240] sm:$0xff]
    %v149 = vld [vmem:[#allocation2 + $0x248] sm:$0xff]
    %v150 = vld [vmem:[#allocation2 + $0x250] sm:$0xff]
    %v151 = vld [vmem:[#allocation2 + $0x258] sm:$0xff]
    %v152 = vld [vmem:[#allocation2 + $0x260] sm:$0xff]
    %v153 = vld [vmem:[#allocation2 + $0x268] sm:$0xff]
    %v154 = vld [vmem:[#allocation2 + $0x270] sm:$0xff]
    %v155 = vld [vmem:[#allocation2 + $0x278] sm:$0xff]
    %v156 = vld [vmem:[#allocation2 + $0x280] sm:$0xff]
    %v157 = vld [vmem:[#allocation2 + $0x288] sm:$0xff]
    %v158 = vld [vmem:[#allocation2 + $0x290] sm:$0xff]
    %v159 = vld [vmem:[#allocation2 + $0x298] sm:$0xff]
    %v160 = vld [vmem:[#allocation2 + $0x2a0] sm:$0xff]
    %v161 = vld [vmem:[#allocation2 + $0x2a8] sm:$0xff]
    %v162 = vld [vmem:[#allocation2 + $0x2b0] sm:$0xff]
    %v163 = vld [vmem:[#allocation2 + $0x2b8] sm:$0xff]
    %v164 = vld [vmem:[#allocation2 + $0x2c0] sm:$0xff]
    %v165 = vld [vmem:[#allocation2 + $0x2c8] sm:$0xff]
    %v166 = vld [vmem:[#allocation2 + $0x2d0] sm:$0xff]
    %v167 = vld [vmem:[#allocation2 + $0x2d8] sm:$0xff]
    %v168 = vld [vmem:[#allocation2 + $0x2e0] sm:$0xff]
    %v169 = vld [vmem:[#allocation2 + $0x2e8] sm:$0xff]
    %v170 = vld [vmem:[#allocation2 + $0x2f0] sm:$0xff]
    %v171 = vld [vmem:[#allocation2 + $0x2f8] sm:$0xff]
    %v172 = vld [vmem:[#allocation2 + $0x300] sm:$0xff]
    %v173 = vld [vmem:[#allocation2 + $0x308] sm:$0xff]
    %v174 = vld [vmem:[#allocation2 + $0x310] sm:$0xff]
    %v175 = vld [vmem:[#allocation2 + $0x318] sm:$0xff]
    %v176 = vld [vmem:[#allocation2 + $0x320] sm:$0xff]
    %v177 = vld [vmem:[#allocation2 + $0x328] sm:$0xff]
    %v178 = vld [vmem:[#allocation2 + $0x330] sm:$0xff]
    %v179 = vld [vmem:[#allocation2 + $0x338] sm:$0xff]
    %v180 = vld [vmem:[#allocation2 + $0x340] sm:$0xff]
    %v181 = vld [vmem:[#allocation2 + $0x348] sm:$0xff]
    %v182 = vld [vmem:[#allocation2 + $0x350] sm:$0xff]
    %v183 = vld [vmem:[#allocation2 + $0x358] sm:$0xff]
    %v184 = vld [vmem:[#allocation2 + $0x360] sm:$0xff]
    %v185 = vld [vmem:[#allocation2 + $0x368] sm:$0xff]
    %v186 = vld [vmem:[#allocation2 + $0x370] sm:$0xff]
    %v187 = vld [vmem:[#allocation2 + $0x378] sm:$0xff]
    %v188 = vld [vmem:[#allocation2 + $0x380] sm:$0xff]
    %v189 = vld [vmem:[#allocation2 + $0x388] sm:$0xff]
    %v190 = vld [vmem:[#allocation2 + $0x390] sm:$0xff]
    %v191 = vld [vmem:[#allocation2 + $0x398] sm:$0xff]
    %v192 = vld [vmem:[#allocation2 + $0x3a0] sm:$0xff]
    %v193 = vld [vmem:[#allocation2 + $0x3a8] sm:$0xff]
    %v194 = vld [vmem:[#allocation2 + $0x3b0] sm:$0xff]
    %v195 = vld [vmem:[#allocation2 + $0x3b8] sm:$0xff]
    %v196 = vld [vmem:[#allocation2 + $0x3c0] sm:$0xff]
    %v197 = vld [vmem:[#allocation2 + $0x3c8] sm:$0xff]
    %v198 = vld [vmem:[#allocation2 + $0x3d0] sm:$0xff]
    %v199 = vld [vmem:[#allocation2 + $0x3d8] sm:$0xff]
    %v200 = vld [vmem:[#allocation2 + $0x3e0] sm:$0xff]
    %v201 = vld [vmem:[#allocation2 + $0x3e8] sm:$0xff]
    %v202 = vld [vmem:[#allocation2 + $0x3f0] sm:$0xff]
    %v203 = vld [vmem:[#allocation2 + $0x3f8] sm:$0xff]
    %v204 = vld [vmem:[#allocation2 + $0x400] sm:$0xff]
    %v205 = vld [vmem:[#allocation2 + $0x408] sm:$0xff]
    %v206 = vld [vmem:[#allocation2 + $0x410] sm:$0xff]
    %v207 = vld [vmem:[#allocation2 + $0x418] sm:$0xff]
    %v208 = vld [vmem:[#allocation2 + $0x420] sm:$0xff]
    %v209 = vld [vmem:[#allocation2 + $0x428] sm:$0xff]
    %v210 = vld [vmem:[#allocation2 + $0x430] sm:$0xff]
    %v211 = vld [vmem:[#allocation2 + $0x438] sm:$0xff]
    %v212 = vld [vmem:[#allocation2 + $0x440] sm:$0xff]
    %v213 = vld [vmem:[#allocation2 + $0x448] sm:$0xff]
    %v214 = vld [vmem:[#allocation2 + $0x450] sm:$0xff]
    %v215 = vld [vmem:[#allocation2 + $0x458] sm:$0xff]
    %v216 = vld [vmem:[#allocation2 + $0x460] sm:$0xff]
    %v217 = vld [vmem:[#allocation2 + $0x468] sm:$0xff]
    %v218 = vld [vmem:[#allocation2 + $0x470] sm:$0xff]
    %v219 = vld [vmem:[#allocation2 + $0x478] sm:$0xff]
    %v220 = vld [vmem:[#allocation2 + $0x480] sm:$0xff]
    %v221 = vld [vmem:[#allocation2 + $0x488] sm:$0xff]
    %v222 = vld [vmem:[#allocation2 + $0x490] sm:$0xff]
    %v223 = vld [vmem:[#allocation2 + $0x498] sm:$0xff]
    %v224 = vld [vmem:[#allocation2 + $0x4a0] sm:$0xff]
    %v225 = vld [vmem:[#allocation2 + $0x4a8] sm:$0xff]
    %v226 = vld [vmem:[#allocation2 + $0x4b0] sm:$0xff]
    %v227 = vld [vmem:[#allocation2 + $0x4b8] sm:$0xff]
    %v228 = vld [vmem:[#allocation2 + $0x4c0] sm:$0xff]
    %v229 = vld [vmem:[#allocation2 + $0x4c8] sm:$0xff]
    %v230 = vld [vmem:[#allocation2 + $0x4d0] sm:$0xff]
    %v231 = vld [vmem:[#allocation2 + $0x4d8] sm:$0xff]
    %v232 = vld [vmem:[#allocation2 + $0x4e0] sm:$0xff]
    %v233 = vld [vmem:[#allocation2 + $0x4e8] sm:$0xff]
    %v234 = vld [vmem:[#allocation2 + $0x4f0] sm:$0xff]
    %v235 = vld [vmem:[#allocation2 + $0x4f8] sm:$0xff]
    %v236 = vld [vmem:[#allocation2 + $0x500] sm:$0xff]
    %v237 = vld [vmem:[#allocation2 + $0x508] sm:$0xff]
    %v238 = vld [vmem:[#allocation2 + $0x510] sm:$0xff]
    %v239 = vld [vmem:[#allocation2 + $0x518] sm:$0xff]
    %v240 = vld [vmem:[#allocation2 + $0x520] sm:$0xff]
    %v241 = vld [vmem:[#allocation2 + $0x528] sm:$0xff]
    %v242 = vld [vmem:[#allocation2 + $0x530] sm:$0xff]
    %v243 = vld [vmem:[#allocation2 + $0x538] sm:$0xff]
    %v244 = vld [vmem:[#allocation2 + $0x540] sm:$0xff]
    %v245 = vld [vmem:[#allocation2 + $0x548] sm:$0xff]
    %v246 = vld [vmem:[#allocation2 + $0x550] sm:$0xff]
    %v247 = vld [vmem:[#allocation2 + $0x558] sm:$0xff]
    %v248 = vld [vmem:[#allocation2 + $0x560] sm:$0xff]
    %v249 = vld [vmem:[#allocation2 + $0x568] sm:$0xff]
    %v250 = vld [vmem:[#allocation2 + $0x570] sm:$0xff]
    %v251 = vld [vmem:[#allocation2 + $0x578] sm:$0xff]
    %v252 = vld [vmem:[#allocation2 + $0x580] sm:$0xff]
    %v253 = vld [vmem:[#allocation2 + $0x588] sm:$0xff]
    %v254 = vld [vmem:[#allocation2 + $0x590] sm:$0xff]
    %v255 = vld [vmem:[#allocation2 + $0x598] sm:$0xff]
    %v256 = vld [vmem:[#allocation2 + $0x5a0] sm:$0xff]
    %v257 = vld [vmem:[#allocation2 + $0x5a8] sm:$0xff]
    %v258 = vld [vmem:[#allocation2 + $0x5b0] sm:$0xff]
    %v259 = vld [vmem:[#allocation2 + $0x5b8] sm:$0xff]
    %v260 = vld [vmem:[#allocation2 + $0x5c0] sm:$0xff]
    %v261 = vld [vmem:[#allocation2 + $0x5c8] sm:$0xff]
    %v262 = vld [vmem:[#allocation2 + $0x5d0] sm:$0xff]
    %v263 = vld [vmem:[#allocation2 + $0x5d8] sm:$0xff]
    %v264 = vld [vmem:[#allocation2 + $0x5e0] sm:$0xff]
    %v265 = vld [vmem:[#allocation2 + $0x5e8] sm:$0xff]
    %v266 = vld [vmem:[#allocation2 + $0x5f0] sm:$0xff]
    %v267 = vld [vmem:[#allocation2 + $0x5f8] sm:$0xff]
    %v268 = vld [vmem:[#allocation2 + $0x600] sm:$0xff]
    %v269 = vld [vmem:[#allocation2 + $0x608] sm:$0xff]
    %v270 = vld [vmem:[#allocation2 + $0x610] sm:$0xff]
    %v271 = vld [vmem:[#allocation2 + $0x618] sm:$0xff]
    %v272 = vld [vmem:[#allocation2 + $0x620] sm:$0xff]
    %v273 = vld [vmem:[#allocation2 + $0x628] sm:$0xff]
    %v274 = vld [vmem:[#allocation2 + $0x630] sm:$0xff]
    %v275 = vld [vmem:[#allocation2 + $0x638] sm:$0xff]
    %v276 = vld [vmem:[#allocation2 + $0x640] sm:$0xff]
    %v277 = vld [vmem:[#allocation2 + $0x648] sm:$0xff]
    %v278 = vld [vmem:[#allocation2 + $0x650] sm:$0xff]
    %v279 = vld [vmem:[#allocation2 + $0x658] sm:$0xff]
    %v280 = vld [vmem:[#allocation2 + $0x660] sm:$0xff]
    %v281 = vld [vmem:[#allocation2 + $0x668] sm:$0xff]
    %v282 = vld [vmem:[#allocation2 + $0x670] sm:$0xff]
    %v283 = vld [vmem:[#allocation2 + $0x678] sm:$0xff]
    %v284 = vld [vmem:[#allocation2 + $0x680] sm:$0xff]
    %v285 = vld [vmem:[#allocation2 + $0x688] sm:$0xff]
    %v286 = vld [vmem:[#allocation2 + $0x690] sm:$0xff]
    %v287 = vld [vmem:[#allocation2 + $0x698] sm:$0xff]
    %v288 = vld [vmem:[#allocation2 + $0x6a0] sm:$0xff]
    %v289 = vld [vmem:[#allocation2 + $0x6a8] sm:$0xff]
    %v290 = vld [vmem:[#allocation2 + $0x6b0] sm:$0xff]
    %v291 = vld [vmem:[#allocation2 + $0x6b8] sm:$0xff]
    %v292 = vld [vmem:[#allocation2 + $0x6c0] sm:$0xff]
    %v293 = vld [vmem:[#allocation2 + $0x6c8] sm:$0xff]
    %v294 = vld [vmem:[#allocation2 + $0x6d0] sm:$0xff]
    %v295 = vld [vmem:[#allocation2 + $0x6d8] sm:$0xff]
    %v296 = vld [vmem:[#allocation2 + $0x6e0] sm:$0xff]
    %v297 = vld [vmem:[#allocation2 + $0x6e8] sm:$0xff]
    %v298 = vld [vmem:[#allocation2 + $0x6f0] sm:$0xff]
    %v299 = vld [vmem:[#allocation2 + $0x6f8] sm:$0xff]
    %v300 = vld [vmem:[%s2] sm:$0xf]
    %v302 = vlaneseq
    %v303 = vshrl.u32 %v302, 7
    %v304 = vsub.s32 0, %v303
    %v305 = vrot.slane %v300, %v304
    %v306 = vlaneseq
    %v307 = vshrl.u32 %v306, 7
    %v308 = vsub.s32 1, %v307
    %v309 = vrot.slane %v300, %v308
    %v310 = vlaneseq
    %v311 = vshrl.u32 %v310, 7
    %v312 = vsub.s32 2, %v311
    %v313 = vrot.slane %v300, %v312
    %v314 = vlaneseq
    %v315 = vshrl.u32 %v314, 7
    %v316 = vsub.s32 3, %v315
    %v317 = vrot.slane %v300, %v316
    %v330 = vunpack.c.l.b16 %v68
    %v331 = vunpack.c.h.b16 %v68
    %v332 = vunpack.c.l.b16 %v69
    %v333 = vunpack.c.h.b16 %v69
    %v334 = vunpack.c.l.b16 %v70
    %v335 = vunpack.c.h.b16 %v70
    %v336 = vunpack.c.l.b16 %v71
    %v337 = vunpack.c.l.b16 %v72
    %v338 = vunpack.c.h.b16 %v72
    %v339 = vunpack.c.l.b16 %v73
    %v340 = vunpack.c.h.b16 %v73
    %v341 = vunpack.c.l.b16 %v74
    %v342 = vunpack.c.h.b16 %v74
    %v343 = vunpack.c.l.b16 %v75
    %v344 = vpack.c.b16 %v337, %v330
    %v345 = vpack.c.b16 %v338, %v331
    %v346 = vpack.c.b16 %v339, %v332
    %v347 = vpack.c.b16 %v340, %v333
    %v348 = vpack.c.b16 %v341, %v334
    %v349 = vpack.c.b16 %v342, %v335
    %v350 = vpack.c.b16 %v343, %v336
    %v582 = vunpack.c.l.b16 %v76
    %v583 = vunpack.c.h.b16 %v76
    %v584 = vunpack.c.l.b16 %v77
    %v585 = vunpack.c.h.b16 %v77
    %v586 = vunpack.c.l.b16 %v78
    %v587 = vunpack.c.h.b16 %v78
    %v588 = vunpack.c.l.b16 %v79
    %v589 = vunpack.c.h.b16 %v79
    %v590 = vunpack.c.l.b16 %v80
    %v591 = vunpack.c.h.b16 %v80
    %v592 = vunpack.c.l.b16 %v81
    %v593 = vunpack.c.h.b16 %v81
    %v594 = vunpack.c.l.b16 %v82
    %v595 = vunpack.c.h.b16 %v82
    %v596 = vunpack.c.l.b16 %v83
    %v597 = vunpack.c.h.b16 %v83
    %v598 = vunpack.c.l.b16 %v84
    %v599 = vunpack.c.h.b16 %v84
    %v600 = vunpack.c.l.b16 %v85
    %v601 = vunpack.c.h.b16 %v85
    %v602 = vunpack.c.l.b16 %v86
    %v603 = vunpack.c.h.b16 %v86
    %v604 = vunpack.c.l.b16 %v87
    %v605 = vunpack.c.h.b16 %v87
    %v606 = vunpack.c.l.b16 %v88
    %v607 = vunpack.c.h.b16 %v88
    %v608 = vunpack.c.l.b16 %v89
    %v609 = vunpack.c.h.b16 %v89
    %v610 = vunpack.c.l.b16 %v90
    %v611 = vunpack.c.h.b16 %v90
    %v612 = vunpack.c.l.b16 %v91
    %v613 = vunpack.c.h.b16 %v91
    %v614 = vunpack.c.l.b16 %v92
    %v615 = vunpack.c.h.b16 %v92
    %v616 = vunpack.c.l.b16 %v93
    %v617 = vunpack.c.h.b16 %v93
    %v618 = vunpack.c.l.b16 %v94
    %v619 = vunpack.c.h.b16 %v94
    %v620 = vunpack.c.l.b16 %v95
    %v621 = vunpack.c.h.b16 %v95
    %v622 = vunpack.c.l.b16 %v96
    %v623 = vunpack.c.h.b16 %v96
    %v624 = vunpack.c.l.b16 %v97
    %v625 = vunpack.c.h.b16 %v97
    %v626 = vunpack.c.l.b16 %v98
    %v627 = vunpack.c.h.b16 %v98
    %v628 = vunpack.c.l.b16 %v99
    %v629 = vunpack.c.h.b16 %v99
    %v630 = vunpack.c.l.b16 %v100
    %v631 = vunpack.c.h.b16 %v100
    %v632 = vunpack.c.l.b16 %v101
    %v633 = vunpack.c.h.b16 %v101
    %v634 = vunpack.c.l.b16 %v102
    %v635 = vunpack.c.h.b16 %v102
    %v636 = vunpack.c.l.b16 %v103
    %v637 = vunpack.c.h.b16 %v103
    %v638 = vunpack.c.l.b16 %v104
    %v639 = vunpack.c.h.b16 %v104
    %v640 = vunpack.c.l.b16 %v105
    %v641 = vunpack.c.h.b16 %v105
    %v642 = vunpack.c.l.b16 %v106
    %v643 = vunpack.c.h.b16 %v106
    %v644 = vunpack.c.l.b16 %v107
    %v645 = vunpack.c.h.b16 %v107
    %v646 = vunpack.c.l.b16 %v108
    %v647 = vunpack.c.h.b16 %v108
    %v648 = vunpack.c.l.b16 %v109
    %v649 = vunpack.c.h.b16 %v109
    %v650 = vunpack.c.l.b16 %v110
    %v651 = vunpack.c.h.b16 %v110
    %v652 = vunpack.c.l.b16 %v111
    %v653 = vunpack.c.h.b16 %v111
    %v654 = vunpack.c.l.b16 %v112
    %v655 = vunpack.c.h.b16 %v112
    %v656 = vunpack.c.l.b16 %v113
    %v657 = vunpack.c.h.b16 %v113
    %v658 = vunpack.c.l.b16 %v114
    %v659 = vunpack.c.h.b16 %v114
    %v660 = vunpack.c.l.b16 %v115
    %v661 = vunpack.c.h.b16 %v115
    %v662 = vunpack.c.l.b16 %v116
    %v663 = vunpack.c.h.b16 %v116
    %v664 = vunpack.c.l.b16 %v117
    %v665 = vunpack.c.h.b16 %v117
    %v666 = vunpack.c.l.b16 %v118
    %v667 = vunpack.c.h.b16 %v118
    %v668 = vunpack.c.l.b16 %v119
    %v669 = vunpack.c.h.b16 %v119
    %v670 = vunpack.c.l.b16 %v120
    %v671 = vunpack.c.h.b16 %v120
    %v672 = vunpack.c.l.b16 %v121
    %v673 = vunpack.c.h.b16 %v121
    %v674 = vunpack.c.l.b16 %v122
    %v675 = vunpack.c.h.b16 %v122
    %v676 = vunpack.c.l.b16 %v123
    %v677 = vunpack.c.h.b16 %v123
    %v678 = vunpack.c.l.b16 %v124
    %v679 = vunpack.c.h.b16 %v124
    %v680 = vunpack.c.l.b16 %v125
    %v681 = vunpack.c.h.b16 %v125
    %v682 = vunpack.c.l.b16 %v126
    %v683 = vunpack.c.h.b16 %v126
    %v684 = vunpack.c.l.b16 %v127
    %v685 = vunpack.c.h.b16 %v127
    %v686 = vunpack.c.l.b16 %v128
    %v687 = vunpack.c.h.b16 %v128
    %v688 = vunpack.c.l.b16 %v129
    %v689 = vunpack.c.h.b16 %v129
    %v690 = vunpack.c.l.b16 %v130
    %v691 = vunpack.c.h.b16 %v130
    %v692 = vunpack.c.l.b16 %v131
    %v693 = vunpack.c.h.b16 %v131
    %v694 = vunpack.c.l.b16 %v132
    %v695 = vunpack.c.h.b16 %v132
    %v696 = vunpack.c.l.b16 %v133
    %v697 = vunpack.c.h.b16 %v133
    %v698 = vunpack.c.l.b16 %v134
    %v699 = vunpack.c.h.b16 %v134
    %v700 = vunpack.c.l.b16 %v135
    %v701 = vunpack.c.h.b16 %v135
    %v702 = vunpack.c.l.b16 %v136
    %v703 = vunpack.c.h.b16 %v136
    %v704 = vunpack.c.l.b16 %v137
    %v705 = vunpack.c.h.b16 %v137
    %v706 = vunpack.c.l.b16 %v138
    %v707 = vunpack.c.h.b16 %v138
    %v708 = vunpack.c.l.b16 %v139
    %v709 = vunpack.c.h.b16 %v139
    %v710 = vunpack.c.l.b16 %v140
    %v711 = vunpack.c.h.b16 %v140
    %v712 = vunpack.c.l.b16 %v141
    %v713 = vunpack.c.h.b16 %v141
    %v714 = vunpack.c.l.b16 %v142
    %v715 = vunpack.c.h.b16 %v142
    %v716 = vunpack.c.l.b16 %v143
    %v717 = vunpack.c.h.b16 %v143
    %v718 = vunpack.c.l.b16 %v144
    %v719 = vunpack.c.h.b16 %v144
    %v720 = vunpack.c.l.b16 %v145
    %v721 = vunpack.c.h.b16 %v145
    %v722 = vunpack.c.l.b16 %v146
    %v723 = vunpack.c.h.b16 %v146
    %v724 = vunpack.c.l.b16 %v147
    %v725 = vunpack.c.h.b16 %v147
    %v726 = vunpack.c.l.b16 %v148
    %v727 = vunpack.c.h.b16 %v148
    %v728 = vunpack.c.l.b16 %v149
    %v729 = vunpack.c.h.b16 %v149
    %v730 = vunpack.c.l.b16 %v150
    %v731 = vunpack.c.h.b16 %v150
    %v732 = vunpack.c.l.b16 %v151
    %v733 = vunpack.c.h.b16 %v151
    %v734 = vunpack.c.l.b16 %v152
    %v735 = vunpack.c.h.b16 %v152
    %v736 = vunpack.c.l.b16 %v153
    %v737 = vunpack.c.h.b16 %v153
    %v738 = vunpack.c.l.b16 %v154
    %v739 = vunpack.c.h.b16 %v154
    %v740 = vunpack.c.l.b16 %v155
    %v741 = vunpack.c.h.b16 %v155
    %v742 = vunpack.c.l.b16 %v156
    %v743 = vunpack.c.h.b16 %v156
    %v744 = vunpack.c.l.b16 %v157
    %v745 = vunpack.c.h.b16 %v157
    %v746 = vunpack.c.l.b16 %v158
    %v747 = vunpack.c.h.b16 %v158
    %v748 = vunpack.c.l.b16 %v159
    %v749 = vunpack.c.h.b16 %v159
    %v750 = vunpack.c.l.b16 %v160
    %v751 = vunpack.c.h.b16 %v160
    %v752 = vunpack.c.l.b16 %v161
    %v753 = vunpack.c.h.b16 %v161
    %v754 = vunpack.c.l.b16 %v162
    %v755 = vunpack.c.h.b16 %v162
    %v756 = vunpack.c.l.b16 %v163
    %v757 = vunpack.c.h.b16 %v163
    %v758 = vunpack.c.l.b16 %v164
    %v759 = vunpack.c.h.b16 %v164
    %v760 = vunpack.c.l.b16 %v165
    %v761 = vunpack.c.h.b16 %v165
    %v762 = vunpack.c.l.b16 %v166
    %v763 = vunpack.c.h.b16 %v166
    %v764 = vunpack.c.l.b16 %v167
    %v765 = vunpack.c.h.b16 %v167
    %v766 = vunpack.c.l.b16 %v168
    %v767 = vunpack.c.h.b16 %v168
    %v768 = vunpack.c.l.b16 %v169
    %v769 = vunpack.c.h.b16 %v169
    %v770 = vunpack.c.l.b16 %v170
    %v771 = vunpack.c.h.b16 %v170
    %v772 = vunpack.c.l.b16 %v171
    %v773 = vunpack.c.h.b16 %v171
    %v774 = vunpack.c.l.b16 %v172
    %v775 = vunpack.c.h.b16 %v172
    %v776 = vunpack.c.l.b16 %v173
    %v777 = vunpack.c.h.b16 %v173
    %v778 = vunpack.c.l.b16 %v174
    %v779 = vunpack.c.h.b16 %v174
    %v780 = vunpack.c.l.b16 %v175
    %v781 = vunpack.c.h.b16 %v175
    %v782 = vunpack.c.l.b16 %v176
    %v783 = vunpack.c.h.b16 %v176
    %v784 = vunpack.c.l.b16 %v177
    %v785 = vunpack.c.h.b16 %v177
    %v786 = vunpack.c.l.b16 %v178
    %v787 = vunpack.c.h.b16 %v178
    %v788 = vunpack.c.l.b16 %v179
    %v789 = vunpack.c.h.b16 %v179
    %v790 = vunpack.c.l.b16 %v180
    %v791 = vunpack.c.h.b16 %v180
    %v792 = vunpack.c.l.b16 %v181
    %v793 = vunpack.c.h.b16 %v181
    %v794 = vunpack.c.l.b16 %v182
    %v795 = vunpack.c.h.b16 %v182
    %v796 = vunpack.c.l.b16 %v183
    %v797 = vunpack.c.h.b16 %v183
    %v798 = vunpack.c.l.b16 %v184
    %v799 = vunpack.c.h.b16 %v184
    %v800 = vunpack.c.l.b16 %v185
    %v801 = vunpack.c.h.b16 %v185
    %v802 = vunpack.c.l.b16 %v186
    %v803 = vunpack.c.h.b16 %v186
    %v804 = vunpack.c.l.b16 %v187
    %v805 = vunpack.c.h.b16 %v187
    %v806 = vunpack.c.l.b16 %v188
    %v807 = vunpack.c.h.b16 %v188
    %v808 = vunpack.c.l.b16 %v189
    %v809 = vunpack.c.h.b16 %v189
    %v810 = vunpack.c.l.b16 %v190
    %v811 = vunpack.c.h.b16 %v190
    %v812 = vunpack.c.l.b16 %v191
    %v813 = vunpack.c.h.b16 %v191
    %v814 = vunpack.c.l.b16 %v192
    %v815 = vunpack.c.h.b16 %v192
    %v816 = vunpack.c.l.b16 %v193
    %v817 = vunpack.c.h.b16 %v193
    %v818 = vunpack.c.l.b16 %v194
    %v819 = vunpack.c.h.b16 %v194
    %v820 = vunpack.c.l.b16 %v195
    %v821 = vunpack.c.h.b16 %v195
    %v822 = vunpack.c.l.b16 %v196
    %v823 = vunpack.c.h.b16 %v196
    %v824 = vunpack.c.l.b16 %v197
    %v825 = vunpack.c.h.b16 %v197
    %v826 = vunpack.c.l.b16 %v198
    %v827 = vunpack.c.h.b16 %v198
    %v828 = vunpack.c.l.b16 %v199
    %v829 = vunpack.c.h.b16 %v199
    %v830 = vunpack.c.l.b16 %v200
    %v831 = vunpack.c.h.b16 %v200
    %v832 = vunpack.c.l.b16 %v201
    %v833 = vunpack.c.h.b16 %v201
    %v834 = vunpack.c.l.b16 %v202
    %v835 = vunpack.c.h.b16 %v202
    %v836 = vunpack.c.l.b16 %v203
    %v837 = vunpack.c.h.b16 %v203
    %v838 = vunpack.c.l.b16 %v204
    %v839 = vunpack.c.h.b16 %v204
    %v840 = vunpack.c.l.b16 %v205
    %v841 = vunpack.c.h.b16 %v205
    %v842 = vunpack.c.l.b16 %v206
    %v843 = vunpack.c.h.b16 %v206
    %v844 = vunpack.c.l.b16 %v207
    %v845 = vunpack.c.h.b16 %v207
    %v846 = vunpack.c.l.b16 %v208
    %v847 = vunpack.c.h.b16 %v208
    %v848 = vunpack.c.l.b16 %v209
    %v849 = vunpack.c.h.b16 %v209
    %v850 = vunpack.c.l.b16 %v210
    %v851 = vunpack.c.h.b16 %v210
    %v852 = vunpack.c.l.b16 %v211
    %v853 = vunpack.c.h.b16 %v211
    %v854 = vunpack.c.l.b16 %v212
    %v855 = vunpack.c.h.b16 %v212
    %v856 = vunpack.c.l.b16 %v213
    %v857 = vunpack.c.h.b16 %v213
    %v858 = vunpack.c.l.b16 %v214
    %v859 = vunpack.c.h.b16 %v214
    %v860 = vunpack.c.l.b16 %v215
    %v861 = vunpack.c.h.b16 %v215
    %v862 = vunpack.c.l.b16 %v216
    %v863 = vunpack.c.h.b16 %v216
    %v864 = vunpack.c.l.b16 %v217
    %v865 = vunpack.c.h.b16 %v217
    %v866 = vunpack.c.l.b16 %v218
    %v867 = vunpack.c.h.b16 %v218
    %v868 = vunpack.c.l.b16 %v219
    %v869 = vunpack.c.h.b16 %v219
    %v870 = vunpack.c.l.b16 %v220
    %v871 = vunpack.c.h.b16 %v220
    %v872 = vunpack.c.l.b16 %v221
    %v873 = vunpack.c.h.b16 %v221
    %v874 = vunpack.c.l.b16 %v222
    %v875 = vunpack.c.h.b16 %v222
    %v876 = vunpack.c.l.b16 %v223
    %v877 = vunpack.c.h.b16 %v223
    %v878 = vunpack.c.l.b16 %v224
    %v879 = vunpack.c.h.b16 %v224
    %v880 = vunpack.c.l.b16 %v225
    %v881 = vunpack.c.h.b16 %v225
    %v882 = vunpack.c.l.b16 %v226
    %v883 = vunpack.c.h.b16 %v226
    %v884 = vunpack.c.l.b16 %v227
    %v885 = vunpack.c.h.b16 %v227
    %v886 = vunpack.c.l.b16 %v228
    %v887 = vunpack.c.h.b16 %v228
    %v888 = vunpack.c.l.b16 %v229
    %v889 = vunpack.c.h.b16 %v229
    %v890 = vunpack.c.l.b16 %v230
    %v891 = vunpack.c.h.b16 %v230
    %v892 = vunpack.c.l.b16 %v231
    %v893 = vunpack.c.h.b16 %v231
    %v894 = vunpack.c.l.b16 %v232
    %v895 = vunpack.c.h.b16 %v232
    %v896 = vunpack.c.l.b16 %v233
    %v897 = vunpack.c.h.b16 %v233
    %v898 = vunpack.c.l.b16 %v234
    %v899 = vunpack.c.h.b16 %v234
    %v900 = vunpack.c.l.b16 %v235
    %v901 = vunpack.c.h.b16 %v235
    %v902 = vunpack.c.l.b16 %v236
    %v903 = vunpack.c.h.b16 %v236
    %v904 = vunpack.c.l.b16 %v237
    %v905 = vunpack.c.h.b16 %v237
    %v906 = vunpack.c.l.b16 %v238
    %v907 = vunpack.c.h.b16 %v238
    %v908 = vunpack.c.l.b16 %v239
    %v909 = vunpack.c.h.b16 %v239
    %v910 = vunpack.c.l.b16 %v240
    %v911 = vunpack.c.h.b16 %v240
    %v912 = vunpack.c.l.b16 %v241
    %v913 = vunpack.c.h.b16 %v241
    %v914 = vunpack.c.l.b16 %v242
    %v915 = vunpack.c.h.b16 %v242
    %v916 = vunpack.c.l.b16 %v243
    %v917 = vunpack.c.h.b16 %v243
    %v918 = vunpack.c.l.b16 %v244
    %v919 = vunpack.c.h.b16 %v244
    %v920 = vunpack.c.l.b16 %v245
    %v921 = vunpack.c.h.b16 %v245
    %v922 = vunpack.c.l.b16 %v246
    %v923 = vunpack.c.h.b16 %v246
    %v924 = vunpack.c.l.b16 %v247
    %v925 = vunpack.c.h.b16 %v247
    %v926 = vunpack.c.l.b16 %v248
    %v927 = vunpack.c.h.b16 %v248
    %v928 = vunpack.c.l.b16 %v249
    %v929 = vunpack.c.h.b16 %v249
    %v930 = vunpack.c.l.b16 %v250
    %v931 = vunpack.c.h.b16 %v250
    %v932 = vunpack.c.l.b16 %v251
    %v933 = vunpack.c.h.b16 %v251
    %v934 = vunpack.c.l.b16 %v252
    %v935 = vunpack.c.h.b16 %v252
    %v936 = vunpack.c.l.b16 %v253
    %v937 = vunpack.c.h.b16 %v253
    %v938 = vunpack.c.l.b16 %v254
    %v939 = vunpack.c.h.b16 %v254
    %v940 = vunpack.c.l.b16 %v255
    %v941 = vunpack.c.h.b16 %v255
    %v942 = vunpack.c.l.b16 %v256
    %v943 = vunpack.c.h.b16 %v256
    %v944 = vunpack.c.l.b16 %v257
    %v945 = vunpack.c.h.b16 %v257
    %v946 = vunpack.c.l.b16 %v258
    %v947 = vunpack.c.h.b16 %v258
    %v948 = vunpack.c.l.b16 %v259
    %v949 = vunpack.c.h.b16 %v259
    %v950 = vunpack.c.l.b16 %v260
    %v951 = vunpack.c.h.b16 %v260
    %v952 = vunpack.c.l.b16 %v261
    %v953 = vunpack.c.h.b16 %v261
    %v954 = vunpack.c.l.b16 %v262
    %v955 = vunpack.c.h.b16 %v262
    %v956 = vunpack.c.l.b16 %v263
    %v957 = vunpack.c.h.b16 %v263
    %v958 = vunpack.c.l.b16 %v264
    %v959 = vunpack.c.h.b16 %v264
    %v960 = vunpack.c.l.b16 %v265
    %v961 = vunpack.c.h.b16 %v265
    %v962 = vunpack.c.l.b16 %v266
    %v963 = vunpack.c.h.b16 %v266
    %v964 = vunpack.c.l.b16 %v267
    %v965 = vunpack.c.h.b16 %v267
    %v966 = vunpack.c.l.b16 %v268
    %v967 = vunpack.c.h.b16 %v268
    %v968 = vunpack.c.l.b16 %v269
    %v969 = vunpack.c.h.b16 %v269
    %v970 = vunpack.c.l.b16 %v270
    %v971 = vunpack.c.h.b16 %v270
    %v972 = vunpack.c.l.b16 %v271
    %v973 = vunpack.c.h.b16 %v271
    %v974 = vunpack.c.l.b16 %v272
    %v975 = vunpack.c.h.b16 %v272
    %v976 = vunpack.c.l.b16 %v273
    %v977 = vunpack.c.h.b16 %v273
    %v978 = vunpack.c.l.b16 %v274
    %v979 = vunpack.c.h.b16 %v274
    %v980 = vunpack.c.l.b16 %v275
    %v981 = vunpack.c.h.b16 %v275
    %v982 = vunpack.c.l.b16 %v276
    %v983 = vunpack.c.h.b16 %v276
    %v984 = vunpack.c.l.b16 %v277
    %v985 = vunpack.c.h.b16 %v277
    %v986 = vunpack.c.l.b16 %v278
    %v987 = vunpack.c.h.b16 %v278
    %v988 = vunpack.c.l.b16 %v279
    %v989 = vunpack.c.h.b16 %v279
    %v990 = vunpack.c.l.b16 %v280
    %v991 = vunpack.c.h.b16 %v280
    %v992 = vunpack.c.l.b16 %v281
    %v993 = vunpack.c.h.b16 %v281
    %v994 = vunpack.c.l.b16 %v282
    %v995 = vunpack.c.h.b16 %v282
    %v996 = vunpack.c.l.b16 %v283
    %v997 = vunpack.c.h.b16 %v283
    %v998 = vunpack.c.l.b16 %v284
    %v999 = vunpack.c.h.b16 %v284
    %v1000 = vunpack.c.l.b16 %v285
    %v1001 = vunpack.c.h.b16 %v285
    %v1002 = vunpack.c.l.b16 %v286
    %v1003 = vunpack.c.h.b16 %v286
    %v1004 = vunpack.c.l.b16 %v287
    %v1005 = vunpack.c.h.b16 %v287
    %v1006 = vunpack.c.l.b16 %v288
    %v1007 = vunpack.c.h.b16 %v288
    %v1008 = vunpack.c.l.b16 %v289
    %v1009 = vunpack.c.h.b16 %v289
    %v1010 = vunpack.c.l.b16 %v290
    %v1011 = vunpack.c.h.b16 %v290
    %v1012 = vunpack.c.l.b16 %v291
    %v1013 = vunpack.c.h.b16 %v291
    %v1014 = vunpack.c.l.b16 %v292
    %v1015 = vunpack.c.h.b16 %v292
    %v1016 = vunpack.c.l.b16 %v293
    %v1017 = vunpack.c.h.b16 %v293
    %v1018 = vunpack.c.l.b16 %v294
    %v1019 = vunpack.c.h.b16 %v294
    %v1020 = vunpack.c.l.b16 %v295
    %v1021 = vunpack.c.h.b16 %v295
    %v1022 = vunpack.c.l.b16 %v296
    %v1023 = vunpack.c.h.b16 %v296
    %v1024 = vunpack.c.l.b16 %v297
    %v1025 = vunpack.c.h.b16 %v297
    %v1026 = vunpack.c.l.b16 %v298
    %v1027 = vunpack.c.h.b16 %v298
    %v1028 = vunpack.c.l.b16 %v299
    %v1029 = vunpack.c.h.b16 %v299
    %v1030 = vpack.c.b16 %v586, %v582
    %v1031 = vpack.c.b16 %v587, %v583
    %v1032 = vpack.c.b16 %v588, %v584
    %v1033 = vpack.c.b16 %v589, %v585
    %v1034 = vpack.c.b16 %v594, %v590
    %v1035 = vpack.c.b16 %v595, %v591
    %v1036 = vpack.c.b16 %v596, %v592
    %v1037 = vpack.c.b16 %v597, %v593
    %v1038 = vpack.c.b16 %v602, %v598
    %v1039 = vpack.c.b16 %v603, %v599
    %v1040 = vpack.c.b16 %v604, %v600
    %v1041 = vpack.c.b16 %v605, %v601
    %v1042 = vpack.c.b16 %v610, %v606
    %v1043 = vpack.c.b16 %v611, %v607
    %v1044 = vpack.c.b16 %v612, %v608
    %v1045 = vpack.c.b16 %v613, %v609
    %v1046 = vpack.c.b16 %v618, %v614
    %v1047 = vpack.c.b16 %v619, %v615
    %v1048 = vpack.c.b16 %v620, %v616
    %v1049 = vpack.c.b16 %v621, %v617
    %v1050 = vpack.c.b16 %v626, %v622
    %v1051 = vpack.c.b16 %v627, %v623
    %v1052 = vpack.c.b16 %v628, %v624
    %v1053 = vpack.c.b16 %v629, %v625
    %v1054 = vpack.c.b16 %v634, %v630
    %v1055 = vpack.c.b16 %v635, %v631
    %v1056 = vpack.c.b16 %v636, %v632
    %v1057 = vpack.c.b16 %v637, %v633
    %v1058 = vpack.c.b16 %v642, %v638
    %v1059 = vpack.c.b16 %v643, %v639
    %v1060 = vpack.c.b16 %v644, %v640
    %v1061 = vpack.c.b16 %v645, %v641
    %v1062 = vpack.c.b16 %v650, %v646
    %v1063 = vpack.c.b16 %v651, %v647
    %v1064 = vpack.c.b16 %v652, %v648
    %v1065 = vpack.c.b16 %v653, %v649
    %v1066 = vpack.c.b16 %v658, %v654
    %v1067 = vpack.c.b16 %v659, %v655
    %v1068 = vpack.c.b16 %v660, %v656
    %v1069 = vpack.c.b16 %v661, %v657
    %v1070 = vpack.c.b16 %v666, %v662
    %v1071 = vpack.c.b16 %v667, %v663
    %v1072 = vpack.c.b16 %v668, %v664
    %v1073 = vpack.c.b16 %v669, %v665
    %v1074 = vpack.c.b16 %v674, %v670
    %v1075 = vpack.c.b16 %v675, %v671
    %v1076 = vpack.c.b16 %v676, %v672
    %v1077 = vpack.c.b16 %v677, %v673
    %v1078 = vpack.c.b16 %v682, %v678
    %v1079 = vpack.c.b16 %v683, %v679
    %v1080 = vpack.c.b16 %v684, %v680
    %v1081 = vpack.c.b16 %v685, %v681
    %v1082 = vpack.c.b16 %v690, %v686
    %v1083 = vpack.c.b16 %v691, %v687
    %v1084 = vpack.c.b16 %v692, %v688
    %v1085 = vpack.c.b16 %v693, %v689
    %v1086 = vpack.c.b16 %v698, %v694
    %v1087 = vpack.c.b16 %v699, %v695
    %v1088 = vpack.c.b16 %v700, %v696
    %v1089 = vpack.c.b16 %v701, %v697
    %v1090 = vpack.c.b16 %v706, %v702
    %v1091 = vpack.c.b16 %v707, %v703
    %v1092 = vpack.c.b16 %v708, %v704
    %v1093 = vpack.c.b16 %v709, %v705
    %v1094 = vpack.c.b16 %v714, %v710
    %v1095 = vpack.c.b16 %v715, %v711
    %v1096 = vpack.c.b16 %v716, %v712
    %v1097 = vpack.c.b16 %v717, %v713
    %v1098 = vpack.c.b16 %v722, %v718
    %v1099 = vpack.c.b16 %v723, %v719
    %v1100 = vpack.c.b16 %v724, %v720
    %v1101 = vpack.c.b16 %v725, %v721
    %v1102 = vpack.c.b16 %v730, %v726
    %v1103 = vpack.c.b16 %v731, %v727
    %v1104 = vpack.c.b16 %v732, %v728
    %v1105 = vpack.c.b16 %v733, %v729
    %v1106 = vpack.c.b16 %v738, %v734
    %v1107 = vpack.c.b16 %v739, %v735
    %v1108 = vpack.c.b16 %v740, %v736
    %v1109 = vpack.c.b16 %v741, %v737
    %v1110 = vpack.c.b16 %v746, %v742
    %v1111 = vpack.c.b16 %v747, %v743
    %v1112 = vpack.c.b16 %v748, %v744
    %v1113 = vpack.c.b16 %v749, %v745
    %v1114 = vpack.c.b16 %v754, %v750
    %v1115 = vpack.c.b16 %v755, %v751
    %v1116 = vpack.c.b16 %v756, %v752
    %v1117 = vpack.c.b16 %v757, %v753
    %v1118 = vpack.c.b16 %v762, %v758
    %v1119 = vpack.c.b16 %v763, %v759
    %v1120 = vpack.c.b16 %v764, %v760
    %v1121 = vpack.c.b16 %v765, %v761
    %v1122 = vpack.c.b16 %v770, %v766
    %v1123 = vpack.c.b16 %v771, %v767
    %v1124 = vpack.c.b16 %v772, %v768
    %v1125 = vpack.c.b16 %v773, %v769
    %v1126 = vpack.c.b16 %v778, %v774
    %v1127 = vpack.c.b16 %v779, %v775
    %v1128 = vpack.c.b16 %v780, %v776
    %v1129 = vpack.c.b16 %v781, %v777
    %v1130 = vpack.c.b16 %v786, %v782
    %v1131 = vpack.c.b16 %v787, %v783
    %v1132 = vpack.c.b16 %v788, %v784
    %v1133 = vpack.c.b16 %v789, %v785
    %v1134 = vpack.c.b16 %v794, %v790
    %v1135 = vpack.c.b16 %v795, %v791
    %v1136 = vpack.c.b16 %v796, %v792
    %v1137 = vpack.c.b16 %v797, %v793
    %v1138 = vpack.c.b16 %v802, %v798
    %v1139 = vpack.c.b16 %v803, %v799
    %v1140 = vpack.c.b16 %v804, %v800
    %v1141 = vpack.c.b16 %v805, %v801
    %v1142 = vpack.c.b16 %v810, %v806
    %v1143 = vpack.c.b16 %v811, %v807
    %v1144 = vpack.c.b16 %v812, %v808
    %v1145 = vpack.c.b16 %v813, %v809
    %v1146 = vpack.c.b16 %v818, %v814
    %v1147 = vpack.c.b16 %v819, %v815
    %v1148 = vpack.c.b16 %v820, %v816
    %v1149 = vpack.c.b16 %v821, %v817
    %v1150 = vpack.c.b16 %v826, %v822
    %v1151 = vpack.c.b16 %v827, %v823
    %v1152 = vpack.c.b16 %v828, %v824
    %v1153 = vpack.c.b16 %v829, %v825
    %v1154 = vpack.c.b16 %v834, %v830
    %v1155 = vpack.c.b16 %v835, %v831
    %v1156 = vpack.c.b16 %v836, %v832
    %v1157 = vpack.c.b16 %v837, %v833
    %v1158 = vpack.c.b16 %v842, %v838
    %v1159 = vpack.c.b16 %v843, %v839
    %v1160 = vpack.c.b16 %v844, %v840
    %v1161 = vpack.c.b16 %v845, %v841
    %v1162 = vpack.c.b16 %v850, %v846
    %v1163 = vpack.c.b16 %v851, %v847
    %v1164 = vpack.c.b16 %v852, %v848
    %v1165 = vpack.c.b16 %v853, %v849
    %v1166 = vpack.c.b16 %v858, %v854
    %v1167 = vpack.c.b16 %v859, %v855
    %v1168 = vpack.c.b16 %v860, %v856
    %v1169 = vpack.c.b16 %v861, %v857
    %v1170 = vpack.c.b16 %v866, %v862
    %v1171 = vpack.c.b16 %v867, %v863
    %v1172 = vpack.c.b16 %v868, %v864
    %v1173 = vpack.c.b16 %v869, %v865
    %v1174 = vpack.c.b16 %v874, %v870
    %v1175 = vpack.c.b16 %v875, %v871
    %v1176 = vpack.c.b16 %v876, %v872
    %v1177 = vpack.c.b16 %v877, %v873
    %v1178 = vpack.c.b16 %v882, %v878
    %v1179 = vpack.c.b16 %v883, %v879
    %v1180 = vpack.c.b16 %v884, %v880
    %v1181 = vpack.c.b16 %v885, %v881
    %v1182 = vpack.c.b16 %v890, %v886
    %v1183 = vpack.c.b16 %v891, %v887
    %v1184 = vpack.c.b16 %v892, %v888
    %v1185 = vpack.c.b16 %v893, %v889
    %v1186 = vpack.c.b16 %v898, %v894
    %v1187 = vpack.c.b16 %v899, %v895
    %v1188 = vpack.c.b16 %v900, %v896
    %v1189 = vpack.c.b16 %v901, %v897
    %v1190 = vpack.c.b16 %v906, %v902
    %v1191 = vpack.c.b16 %v907, %v903
    %v1192 = vpack.c.b16 %v908, %v904
    %v1193 = vpack.c.b16 %v909, %v905
    %v1194 = vpack.c.b16 %v914, %v910
    %v1195 = vpack.c.b16 %v915, %v911
    %v1196 = vpack.c.b16 %v916, %v912
    %v1197 = vpack.c.b16 %v917, %v913
    %v1198 = vpack.c.b16 %v922, %v918
    %v1199 = vpack.c.b16 %v923, %v919
    %v1200 = vpack.c.b16 %v924, %v920
    %v1201 = vpack.c.b16 %v925, %v921
    %v1202 = vpack.c.b16 %v930, %v926
    %v1203 = vpack.c.b16 %v931, %v927
    %v1204 = vpack.c.b16 %v932, %v928
    %v1205 = vpack.c.b16 %v933, %v929
    %v1206 = vpack.c.b16 %v938, %v934
    %v1207 = vpack.c.b16 %v939, %v935
    %v1208 = vpack.c.b16 %v940, %v936
    %v1209 = vpack.c.b16 %v941, %v937
    %v1210 = vpack.c.b16 %v946, %v942
    %v1211 = vpack.c.b16 %v947, %v943
    %v1212 = vpack.c.b16 %v948, %v944
    %v1213 = vpack.c.b16 %v949, %v945
    %v1214 = vpack.c.b16 %v954, %v950
    %v1215 = vpack.c.b16 %v955, %v951
    %v1216 = vpack.c.b16 %v956, %v952
    %v1217 = vpack.c.b16 %v957, %v953
    %v1218 = vpack.c.b16 %v962, %v958
    %v1219 = vpack.c.b16 %v963, %v959
    %v1220 = vpack.c.b16 %v964, %v960
    %v1221 = vpack.c.b16 %v965, %v961
    %v1222 = vpack.c.b16 %v970, %v966
    %v1223 = vpack.c.b16 %v971, %v967
    %v1224 = vpack.c.b16 %v972, %v968
    %v1225 = vpack.c.b16 %v973, %v969
    %v1226 = vpack.c.b16 %v978, %v974
    %v1227 = vpack.c.b16 %v979, %v975
    %v1228 = vpack.c.b16 %v980, %v976
    %v1229 = vpack.c.b16 %v981, %v977
    %v1230 = vpack.c.b16 %v986, %v982
    %v1231 = vpack.c.b16 %v987, %v983
    %v1232 = vpack.c.b16 %v988, %v984
    %v1233 = vpack.c.b16 %v989, %v985
    %v1234 = vpack.c.b16 %v994, %v990
    %v1235 = vpack.c.b16 %v995, %v991
    %v1236 = vpack.c.b16 %v996, %v992
    %v1237 = vpack.c.b16 %v997, %v993
    %v1238 = vpack.c.b16 %v1002, %v998
    %v1239 = vpack.c.b16 %v1003, %v999
    %v1240 = vpack.c.b16 %v1004, %v1000
    %v1241 = vpack.c.b16 %v1005, %v1001
    %v1242 = vpack.c.b16 %v1010, %v1006
    %v1243 = vpack.c.b16 %v1011, %v1007
    %v1244 = vpack.c.b16 %v1012, %v1008
    %v1245 = vpack.c.b16 %v1013, %v1009
    %v1246 = vpack.c.b16 %v1018, %v1014
    %v1247 = vpack.c.b16 %v1019, %v1015
    %v1248 = vpack.c.b16 %v1020, %v1016
    %v1249 = vpack.c.b16 %v1021, %v1017
    %v1250 = vpack.c.b16 %v1026, %v1022
    %v1251 = vpack.c.b16 %v1027, %v1023
    %v1252 = vpack.c.b16 %v1028, %v1024
    %v1253 = vpack.c.b16 %v1029, %v1025
    %1478 = vmatprep.subr.bf16.mxu0 %v1031
    %1479 = vmatpush1.bf16.msra.mxu0 %v1030
    %1480 = vmatprep.subr.bf16.mxu0 %v1035
    %1481 = vmatpush1.bf16.msra.mxu0 %v1034
    %1482 = vmatprep.subr.bf16.mxu0 %v1039
    %1483 = vmatpush1.bf16.msra.mxu0 %v1038
    %1484 = vmatprep.subr.bf16.mxu0 %v1043
    %1485 = vmatpush1.bf16.msra.mxu0 %v1042
    %1486 = vmatprep.subr.bf16.mxu0 %v1047
    %1487 = vmatpush1.bf16.msra.mxu0 %v1046
    %1488 = vmatprep.subr.bf16.mxu0 %v1051
    %1489 = vmatpush1.bf16.msra.mxu0 %v1050
    %1490 = vmatprep.subr.bf16.mxu0 %v1055
    %1491 = vmatpush1.bf16.msra.mxu0 %v1054
    %1492 = vmatprep.subr.bf16.mxu0 %v1059
    %1493 = vmatpush1.bf16.msra.mxu0 %v1058
    %1494 = vmatprep.subr.bf16.mxu0 %v1063
    %1495 = vmatpush1.bf16.msra.mxu0 %v1062
    %1496 = vmatprep.subr.bf16.mxu0 %v1067
    %1497 = vmatpush1.bf16.msra.mxu0 %v1066
    %1498 = vmatprep.subr.bf16.mxu0 %v1071
    %1499 = vmatpush1.bf16.msra.mxu0 %v1070
    %1500 = vmatprep.subr.bf16.mxu0 %v1075
    %1501 = vmatpush1.bf16.msra.mxu0 %v1074
    %1502 = vmatprep.subr.bf16.mxu0 %v1079
    %1503 = vmatpush1.bf16.msra.mxu0 %v1078
    %1504 = vmatprep.subr.bf16.mxu0 %v1083
    %1505 = vmatpush1.bf16.msra.mxu0 %v1082
    %1506 = vmatprep.subr.bf16.mxu0 %v1087
    %1507 = vmatpush1.bf16.msra.mxu0 %v1086
    %1508 = vmatprep.subr.bf16.mxu0 %v1091
    %1509 = vmatpush1.bf16.msra.mxu0 %v1090
    %1510 = vmatprep.mubr.bf16.mxu0 %v345
    %1511 = vmatmul.mubr.bf16.gmra.mrb[0].mxu0 %v344
    %v1512 = vpop.f32.mrb[0].mxu0
    %v1513 = vadd.f32 %v305, %v1512
    %v1514 = vpop.f32.mrb[0].mxu0
    %v1515 = vadd.f32 %v309, %v1514
    %v1516 = vpop.f32.mrb[0].mxu0
    %v1517 = vadd.f32 %v305, %v1516
    %v1518 = vpop.f32.mrb[0].mxu0
    %v1519 = vadd.f32 %v309, %v1518
    %1520 = vdwg.mxu0
    %1521 = vmatprep.subr.bf16.mxu0 %v1095
    %1522 = vmatpush1.bf16.msra.mxu0 %v1094
    %1523 = vmatprep.subr.bf16.mxu0 %v1099
    %1524 = vmatpush1.bf16.msra.mxu0 %v1098
    %1525 = vmatprep.subr.bf16.mxu0 %v1103
    %1526 = vmatpush1.bf16.msra.mxu0 %v1102
    %1527 = vmatprep.subr.bf16.mxu0 %v1107
    %1528 = vmatpush1.bf16.msra.mxu0 %v1106
    %1529 = vmatprep.subr.bf16.mxu0 %v1111
    %1530 = vmatpush1.bf16.msra.mxu0 %v1110
    %1531 = vmatprep.subr.bf16.mxu0 %v1115
    %1532 = vmatpush1.bf16.msra.mxu0 %v1114
    %1533 = vmatprep.subr.bf16.mxu0 %v1119
    %1534 = vmatpush1.bf16.msra.mxu0 %v1118
    %1535 = vmatprep.subr.bf16.mxu0 %v1123
    %1536 = vmatpush1.bf16.msra.mxu0 %v1122
    %1537 = vmatprep.subr.bf16.mxu0 %v1127
    %1538 = vmatpush1.bf16.msra.mxu0 %v1126
    %1539 = vmatprep.subr.bf16.mxu0 %v1131
    %1540 = vmatpush1.bf16.msra.mxu0 %v1130
    %1541 = vmatprep.subr.bf16.mxu0 %v1135
    %1542 = vmatpush1.bf16.msra.mxu0 %v1134
    %1543 = vmatprep.subr.bf16.mxu0 %v1139
    %1544 = vmatpush1.bf16.msra.mxu0 %v1138
    %1545 = vmatprep.subr.bf16.mxu0 %v1143
    %1546 = vmatpush1.bf16.msra.mxu0 %v1142
    %1547 = vmatprep.subr.bf16.mxu0 %v1147
    %1548 = vmatpush1.bf16.msra.mxu0 %v1146
    %1549 = vmatprep.subr.bf16.mxu0 %v1151
    %1550 = vmatpush1.bf16.msra.mxu0 %v1150
    %1551 = vmatprep.subr.bf16.mxu0 %v1155
    %1552 = vmatpush1.bf16.msra.mxu0 %v1154
    %1553 = vmatprep.mubr.bf16.mxu0 %v347
    %1554 = vmatmul.mubr.bf16.gmra.mrb[0].mxu0 %v346
    %v1555 = vpop.f32.mrb[0].mxu0
    %v1556 = vadd.f32 %v1513, %v1555
    %v1557 = vpop.f32.mrb[0].mxu0
    %v1558 = vadd.f32 %v1515, %v1557
    %v1559 = vpop.f32.mrb[0].mxu0
    %v1560 = vadd.f32 %v1517, %v1559
    %v1561 = vpop.f32.mrb[0].mxu0
    %v1562 = vadd.f32 %v1519, %v1561
    %1563 = vdwg.mxu0
    %1564 = vmatprep.subr.bf16.mxu0 %v1159
    %1565 = vmatpush1.bf16.msra.mxu0 %v1158
    %1566 = vmatprep.subr.bf16.mxu0 %v1163
    %1567 = vmatpush1.bf16.msra.mxu0 %v1162
    %1568 = vmatprep.subr.bf16.mxu0 %v1167
    %1569 = vmatpush1.bf16.msra.mxu0 %v1166
    %1570 = vmatprep.subr.bf16.mxu0 %v1171
    %1571 = vmatpush1.bf16.msra.mxu0 %v1170
    %1572 = vmatprep.subr.bf16.mxu0 %v1175
    %1573 = vmatpush1.bf16.msra.mxu0 %v1174
    %1574 = vmatprep.subr.bf16.mxu0 %v1179
    %1575 = vmatpush1.bf16.msra.mxu0 %v1178
    %1576 = vmatprep.subr.bf16.mxu0 %v1183
    %1577 = vmatpush1.bf16.msra.mxu0 %v1182
    %1578 = vmatprep.subr.bf16.mxu0 %v1187
    %1579 = vmatpush1.bf16.msra.mxu0 %v1186
    %1580 = vmatprep.subr.bf16.mxu0 %v1191
    %1581 = vmatpush1.bf16.msra.mxu0 %v1190
    %1582 = vmatprep.subr.bf16.mxu0 %v1195
    %1583 = vmatpush1.bf16.msra.mxu0 %v1194
    %1584 = vmatprep.subr.bf16.mxu0 %v1199
    %1585 = vmatpush1.bf16.msra.mxu0 %v1198
    %1586 = vmatprep.subr.bf16.mxu0 %v1203
    %1587 = vmatpush1.bf16.msra.mxu0 %v1202
    %1588 = vmatprep.subr.bf16.mxu0 %v1207
    %1589 = vmatpush1.bf16.msra.mxu0 %v1206
    %1590 = vmatprep.subr.bf16.mxu0 %v1211
    %1591 = vmatpush1.bf16.msra.mxu0 %v1210
    %1592 = vmatprep.subr.bf16.mxu0 %v1215
    %1593 = vmatpush1.bf16.msra.mxu0 %v1214
    %1594 = vmatprep.subr.bf16.mxu0 %v1219
    %1595 = vmatpush1.bf16.msra.mxu0 %v1218
    %1596 = vmatprep.mubr.bf16.mxu0 %v349
    %1597 = vmatmul.mubr.bf16.gmra.mrb[0].mxu0 %v348
    %v1598 = vpop.f32.mrb[0].mxu0
    %v1599 = vadd.f32 %v1556, %v1598
    %v1600 = vpop.f32.mrb[0].mxu0
    %v1601 = vadd.f32 %v1558, %v1600
    %v1602 = vpop.f32.mrb[0].mxu0
    %v1603 = vadd.f32 %v1560, %v1602
    %v1604 = vpop.f32.mrb[0].mxu0
    %v1605 = vadd.f32 %v1562, %v1604
    %1606 = vdwg.mxu0
    %1607 = vmatprep.subr.bf16.mxu0 %v1223
    %1608 = vmatpush1.bf16.msra.mxu0 %v1222
    %1609 = vmatprep.subr.bf16.mxu0 %v1227
    %1610 = vmatpush1.bf16.msra.mxu0 %v1226
    %1611 = vmatprep.subr.bf16.mxu0 %v1231
    %1612 = vmatpush1.bf16.msra.mxu0 %v1230
    %1613 = vmatprep.subr.bf16.mxu0 %v1235
    %1614 = vmatpush1.bf16.msra.mxu0 %v1234
    %1615 = vmatprep.subr.bf16.mxu0 %v1239
    %1616 = vmatpush1.bf16.msra.mxu0 %v1238
    %1617 = vmatprep.subr.bf16.mxu0 %v1243
    %1618 = vmatpush1.bf16.msra.mxu0 %v1242
    %1619 = vmatprep.subr.bf16.mxu0 %v1247
    %1620 = vmatpush1.bf16.msra.mxu0 %v1246
    %1621 = vmatprep.subr.bf16.mxu0 %v1251
    %1622 = vmatpush1.bf16.msra.mxu0 %v1250
    %1623 = vmatprep.subr.bf16.mxu0 0
    %1624 = vmatpush1.bf16.msra.mxu0 0
    %1625 = vmatprep.subr.bf16.mxu0 0
    %1626 = vmatpush1.bf16.msra.mxu0 0
    %1627 = vmatprep.subr.bf16.mxu0 0
    %1628 = vmatpush1.bf16.msra.mxu0 0
    %1629 = vmatprep.subr.bf16.mxu0 0
    %1630 = vmatpush1.bf16.msra.mxu0 0
    %1631 = vmatprep.subr.bf16.mxu0 0
    %1632 = vmatpush1.bf16.msra.mxu0 0
    %1633 = vmatprep.subr.bf16.mxu0 0
    %1634 = vmatpush1.bf16.msra.mxu0 0
    %1635 = vmatprep.subr.bf16.mxu0 0
    %1636 = vmatpush1.bf16.msra.mxu0 0
    %1637 = vmatprep.subr.bf16.mxu0 0
    %1638 = vmatpush1.bf16.msra.mxu0 0
    %1639 = vmatprep.mubr.bf16.mxu0 0
    %1640 = vmatmul.mubr.bf16.gmra.mrb[0].mxu0 %v350
    %v1641 = vpop.f32.mrb[0].mxu0
    %v1642 = vadd.f32 %v1599, %v1641
    %v1643 = vpop.f32.mrb[0].mxu0
    %v1644 = vadd.f32 %v1601, %v1643
    %v1645 = vpop.f32.mrb[0].mxu0
    %v1646 = vadd.f32 %v1603, %v1645
    %v1647 = vpop.f32.mrb[0].mxu0
    %v1648 = vadd.f32 %v1605, %v1647
    %1649 = vdwg.mxu0
    %1650 = vmatprep.subr.bf16.mxu0 %v1033
    %1651 = vmatpush1.bf16.msra.mxu0 %v1032
    %1652 = vmatprep.subr.bf16.mxu0 %v1037
    %1653 = vmatpush1.bf16.msra.mxu0 %v1036
    %1654 = vmatprep.subr.bf16.mxu0 %v1041
    %1655 = vmatpush1.bf16.msra.mxu0 %v1040
    %1656 = vmatprep.subr.bf16.mxu0 %v1045
    %1657 = vmatpush1.bf16.msra.mxu0 %v1044
    %1658 = vmatprep.subr.bf16.mxu0 %v1049
    %1659 = vmatpush1.bf16.msra.mxu0 %v1048
    %1660 = vmatprep.subr.bf16.mxu0 %v1053
    %1661 = vmatpush1.bf16.msra.mxu0 %v1052
    %1662 = vmatprep.subr.bf16.mxu0 %v1057
    %1663 = vmatpush1.bf16.msra.mxu0 %v1056
    %1664 = vmatprep.subr.bf16.mxu0 %v1061
    %1665 = vmatpush1.bf16.msra.mxu0 %v1060
    %1666 = vmatprep.subr.bf16.mxu0 %v1065
    %1667 = vmatpush1.bf16.msra.mxu0 %v1064
    %1668 = vmatprep.subr.bf16.mxu0 %v1069
    %1669 = vmatpush1.bf16.msra.mxu0 %v1068
    %1670 = vmatprep.subr.bf16.mxu0 %v1073
    %1671 = vmatpush1.bf16.msra.mxu0 %v1072
    %1672 = vmatprep.subr.bf16.mxu0 %v1077
    %1673 = vmatpush1.bf16.msra.mxu0 %v1076
    %1674 = vmatprep.subr.bf16.mxu0 %v1081
    %1675 = vmatpush1.bf16.msra.mxu0 %v1080
    %1676 = vmatprep.subr.bf16.mxu0 %v1085
    %1677 = vmatpush1.bf16.msra.mxu0 %v1084
    %1678 = vmatprep.subr.bf16.mxu0 %v1089
    %1679 = vmatpush1.bf16.msra.mxu0 %v1088
    %1680 = vmatprep.subr.bf16.mxu0 %v1093
    %1681 = vmatpush1.bf16.msra.mxu0 %v1092
    %1682 = vmatprep.mubr.bf16.mxu0 %v345
    %1683 = vmatmul.mubr.bf16.gmra.mrb[0].mxu0 %v344
    %v1684 = vpop.f32.mrb[0].mxu0
    %v1685 = vadd.f32 %v313, %v1684
    %v1686 = vpop.f32.mrb[0].mxu0
    %v1687 = vadd.f32 %v317, %v1686
    %v1688 = vpop.f32.mrb[0].mxu0
    %v1689 = vadd.f32 %v313, %v1688
    %v1690 = vpop.f32.mrb[0].mxu0
    %v1691 = vadd.f32 %v317, %v1690
    %1692 = vdwg.mxu0
    %1693 = vmatprep.subr.bf16.mxu0 %v1097
    %1694 = vmatpush1.bf16.msra.mxu0 %v1096
    %1695 = vmatprep.subr.bf16.mxu0 %v1101
    %1696 = vmatpush1.bf16.msra.mxu0 %v1100
    %1697 = vmatprep.subr.bf16.mxu0 %v1105
    %1698 = vmatpush1.bf16.msra.mxu0 %v1104
    %1699 = vmatprep.subr.bf16.mxu0 %v1109
    %1700 = vmatpush1.bf16.msra.mxu0 %v1108
    %1701 = vmatprep.subr.bf16.mxu0 %v1113
    %1702 = vmatpush1.bf16.msra.mxu0 %v1112
    %1703 = vmatprep.subr.bf16.mxu0 %v1117
    %1704 = vmatpush1.bf16.msra.mxu0 %v1116
    %1705 = vmatprep.subr.bf16.mxu0 %v1121
    %1706 = vmatpush1.bf16.msra.mxu0 %v1120
    %1707 = vmatprep.subr.bf16.mxu0 %v1125
    %1708 = vmatpush1.bf16.msra.mxu0 %v1124
    %1709 = vmatprep.subr.bf16.mxu0 %v1129
    %1710 = vmatpush1.bf16.msra.mxu0 %v1128
    %1711 = vmatprep.subr.bf16.mxu0 %v1133
    %1712 = vmatpush1.bf16.msra.mxu0 %v1132
    %1713 = vmatprep.subr.bf16.mxu0 %v1137
    %1714 = vmatpush1.bf16.msra.mxu0 %v1136
    %1715 = vmatprep.subr.bf16.mxu0 %v1141
    %1716 = vmatpush1.bf16.msra.mxu0 %v1140
    %1717 = vmatprep.subr.bf16.mxu0 %v1145
    %1718 = vmatpush1.bf16.msra.mxu0 %v1144
    %1719 = vmatprep.subr.bf16.mxu0 %v1149
    %1720 = vmatpush1.bf16.msra.mxu0 %v1148
    %1721 = vmatprep.subr.bf16.mxu0 %v1153
    %1722 = vmatpush1.bf16.msra.mxu0 %v1152
    %1723 = vmatprep.subr.bf16.mxu0 %v1157
    %1724 = vmatpush1.bf16.msra.mxu0 %v1156
    %1725 = vmatprep.mubr.bf16.mxu0 %v347
    %1726 = vmatmul.mubr.bf16.gmra.mrb[0].mxu0 %v346
    %v1727 = vpop.f32.mrb[0].mxu0
    %v1728 = vadd.f32 %v1685, %v1727
    %v1729 = vpop.f32.mrb[0].mxu0
    %v1730 = vadd.f32 %v1687, %v1729
    %v1731 = vpop.f32.mrb[0].mxu0
    %v1732 = vadd.f32 %v1689, %v1731
    %v1733 = vpop.f32.mrb[0].mxu0
    %v1734 = vadd.f32 %v1691, %v1733
    %1735 = vdwg.mxu0
    %1736 = vmatprep.subr.bf16.mxu0 %v1161
    %1737 = vmatpush1.bf16.msra.mxu0 %v1160
    %1738 = vmatprep.subr.bf16.mxu0 %v1165
    %1739 = vmatpush1.bf16.msra.mxu0 %v1164
    %1740 = vmatprep.subr.bf16.mxu0 %v1169
    %1741 = vmatpush1.bf16.msra.mxu0 %v1168
    %1742 = vmatprep.subr.bf16.mxu0 %v1173
    %1743 = vmatpush1.bf16.msra.mxu0 %v1172
    %1744 = vmatprep.subr.bf16.mxu0 %v1177
    %1745 = vmatpush1.bf16.msra.mxu0 %v1176
    %1746 = vmatprep.subr.bf16.mxu0 %v1181
    %1747 = vmatpush1.bf16.msra.mxu0 %v1180
    %1748 = vmatprep.subr.bf16.mxu0 %v1185
    %1749 = vmatpush1.bf16.msra.mxu0 %v1184
    %1750 = vmatprep.subr.bf16.mxu0 %v1189
    %1751 = vmatpush1.bf16.msra.mxu0 %v1188
    %1752 = vmatprep.subr.bf16.mxu0 %v1193
    %1753 = vmatpush1.bf16.msra.mxu0 %v1192
    %1754 = vmatprep.subr.bf16.mxu0 %v1197
    %1755 = vmatpush1.bf16.msra.mxu0 %v1196
    %1756 = vmatprep.subr.bf16.mxu0 %v1201
    %1757 = vmatpush1.bf16.msra.mxu0 %v1200
    %1758 = vmatprep.subr.bf16.mxu0 %v1205
    %1759 = vmatpush1.bf16.msra.mxu0 %v1204
    %1760 = vmatprep.subr.bf16.mxu0 %v1209
    %1761 = vmatpush1.bf16.msra.mxu0 %v1208
    %1762 = vmatprep.subr.bf16.mxu0 %v1213
    %1763 = vmatpush1.bf16.msra.mxu0 %v1212
    %1764 = vmatprep.subr.bf16.mxu0 %v1217
    %1765 = vmatpush1.bf16.msra.mxu0 %v1216
    %1766 = vmatprep.subr.bf16.mxu0 %v1221
    %1767 = vmatpush1.bf16.msra.mxu0 %v1220
    %1768 = vmatprep.mubr.bf16.mxu0 %v349
    %1769 = vmatmul.mubr.bf16.gmra.mrb[0].mxu0 %v348
    %v1770 = vpop.f32.mrb[0].mxu0
    %v1771 = vadd.f32 %v1728, %v1770
    %v1772 = vpop.f32.mrb[0].mxu0
    %v1773 = vadd.f32 %v1730, %v1772
    %v1774 = vpop.f32.mrb[0].mxu0
    %v1775 = vadd.f32 %v1732, %v1774
    %v1776 = vpop.f32.mrb[0].mxu0
    %v1777 = vadd.f32 %v1734, %v1776
    %1778 = vdwg.mxu0
    %1779 = vmatprep.subr.bf16.mxu0 %v1225
    %1780 = vmatpush1.bf16.msra.mxu0 %v1224
    %1781 = vmatprep.subr.bf16.mxu0 %v1229
    %1782 = vmatpush1.bf16.msra.mxu0 %v1228
    %1783 = vmatprep.subr.bf16.mxu0 %v1233
    %1784 = vmatpush1.bf16.msra.mxu0 %v1232
    %1785 = vmatprep.subr.bf16.mxu0 %v1237
    %1786 = vmatpush1.bf16.msra.mxu0 %v1236
    %1787 = vmatprep.subr.bf16.mxu0 %v1241
    %1788 = vmatpush1.bf16.msra.mxu0 %v1240
    %1789 = vmatprep.subr.bf16.mxu0 %v1245
    %1790 = vmatpush1.bf16.msra.mxu0 %v1244
    %1791 = vmatprep.subr.bf16.mxu0 %v1249
    %1792 = vmatpush1.bf16.msra.mxu0 %v1248
    %1793 = vmatprep.subr.bf16.mxu0 %v1253
    %1794 = vmatpush1.bf16.msra.mxu0 %v1252
    %1795 = vmatprep.subr.bf16.mxu0 0
    %1796 = vmatpush1.bf16.msra.mxu0 0
    %1797 = vmatprep.subr.bf16.mxu0 0
    %1798 = vmatpush1.bf16.msra.mxu0 0
    %1799 = vmatprep.subr.bf16.mxu0 0
    %1800 = vmatpush1.bf16.msra.mxu0 0
    %1801 = vmatprep.subr.bf16.mxu0 0
    %1802 = vmatpush1.bf16.msra.mxu0 0
    %1803 = vmatprep.subr.bf16.mxu0 0
    %1804 = vmatpush1.bf16.msra.mxu0 0
    %1805 = vmatprep.subr.bf16.mxu0 0
    %1806 = vmatpush1.bf16.msra.mxu0 0
    %1807 = vmatprep.subr.bf16.mxu0 0
    %1808 = vmatpush1.bf16.msra.mxu0 0
    %1809 = vmatprep.subr.bf16.mxu0 0
    %1810 = vmatpush1.bf16.msra.mxu0 0
    %1811 = vmatprep.mubr.bf16.mxu0 0
    %1812 = vmatmul.mubr.bf16.gmra.mrb[0].mxu0 %v350
    %v1813 = vpop.f32.mrb[0].mxu0
    %v1814 = vadd.f32 %v1771, %v1813
    %v1815 = vpop.f32.mrb[0].mxu0
    %v1816 = vadd.f32 %v1773, %v1815
    %v1817 = vpop.f32.mrb[0].mxu0
    %v1818 = vadd.f32 %v1775, %v1817
    %v1819 = vpop.f32.mrb[0].mxu0
    %v1820 = vadd.f32 %v1777, %v1819
    %1821 = vdwg.mxu0
    %v1822 = vmax.f32 %v1642, 0.0
    %v1823 = vmax.f32 %v1644, 0.0
    %v1824 = vmax.f32 %v1814, 0.0
    %v1825 = vmax.f32 %v1816, 0.0
    %v1826 = vmax.f32 %v1646, 0.0
    %v1827 = vmax.f32 %v1648, 0.0
    %v1828 = vmax.f32 %v1818, 0.0
    %v1829 = vmax.f32 %v1820, 0.0
    %v1830 = vpack.c.bf16 %v1826, %v1822
    %v1831 = vpack.c.bf16 %v1827, %v1823
    %v1832 = vpack.c.bf16 %v1828, %v1824
    %v1833 = vpack.c.bf16 %v1829, %v1825
    %v1834 = vld [vmem:[#allocation4] sm:$0xff]
    %v1835 = vld [vmem:[#allocation4 + $0x8] sm:$0xff]
    %v1836 = vld [vmem:[#allocation4 + $0x10] sm:$0xff]
    %v1837 = vld [vmem:[#allocation4 + $0x18] sm:$0xff]
    %v1838 = vld [vmem:[#allocation4 + $0x20] sm:$0xff]
    %v1839 = vld [vmem:[#allocation4 + $0x28] sm:$0xff]
    %v1840 = vld [vmem:[#allocation4 + $0x30] sm:$0xff]
    %v1841 = vld [vmem:[#allocation4 + $0x38] sm:$0xff]
    %v1842 = vld [vmem:[#allocation4 + $0x40] sm:$0xff]
    %v1843 = vld [vmem:[#allocation4 + $0x48] sm:$0xff]
    %v1844 = vld [vmem:[#allocation4 + $0x50] sm:$0xff]
    %v1845 = vld [vmem:[#allocation4 + $0x58] sm:$0xff]
    %v1846 = vld [vmem:[#allocation4 + $0x60] sm:$0xff]
    %v1847 = vld [vmem:[#allocation4 + $0x68] sm:$0xff]
    %v1848 = vld [vmem:[#allocation4 + $0x70] sm:$0xff]
    %v1849 = vld [vmem:[#allocation4 + $0x78] sm:$0xff]
    %v1850 = vld [vmem:[#allocation4 + $0x80] sm:$0xff]
    %v1851 = vld [vmem:[#allocation4 + $0x88] sm:$0xff]
    %v1852 = vld [vmem:[#allocation4 + $0x90] sm:$0xff]
    %v1853 = vld [vmem:[#allocation4 + $0x98] sm:$0xff]
    %v1854 = vld [vmem:[#allocation4 + $0xa0] sm:$0xff]
    %v1855 = vld [vmem:[#allocation4 + $0xa8] sm:$0xff]
    %v1856 = vld [vmem:[#allocation4 + $0xb0] sm:$0xff]
    %v1857 = vld [vmem:[#allocation4 + $0xb8] sm:$0xff]
    %v1858 = vld [vmem:[#allocation4 + $0xc0] sm:$0xff]
    %v1859 = vld [vmem:[#allocation4 + $0xc8] sm:$0xff]
    %v1860 = vld [vmem:[#allocation4 + $0xd0] sm:$0xff]
    %v1861 = vld [vmem:[#allocation4 + $0xd8] sm:$0xff]
    %v1862 = vld [vmem:[#allocation4 + $0xe0] sm:$0xff]
    %v1863 = vld [vmem:[#allocation4 + $0xe8] sm:$0xff]
    %v1864 = vld [vmem:[#allocation4 + $0xf0] sm:$0xff]
    %v1865 = vld [vmem:[#allocation4 + $0xf8] sm:$0xff]
    %v1866 = vld [vmem:[#allocation4 + $0x100] sm:$0xff]
    %v1867 = vld [vmem:[#allocation4 + $0x108] sm:$0xff]
    %v1868 = vld [vmem:[#allocation4 + $0x110] sm:$0xff]
    %v1869 = vld [vmem:[#allocation4 + $0x118] sm:$0xff]
    %v1870 = vld [vmem:[#allocation4 + $0x120] sm:$0xff]
    %v1871 = vld [vmem:[#allocation4 + $0x128] sm:$0xff]
    %v1872 = vld [vmem:[#allocation4 + $0x130] sm:$0xff]
    %v1873 = vld [vmem:[#allocation4 + $0x138] sm:$0xff]
    %v1874 = vld [vmem:[#allocation4 + $0x140] sm:$0xff]
    %v1875 = vld [vmem:[#allocation4 + $0x148] sm:$0xff]
    %v1876 = vld [vmem:[#allocation4 + $0x150] sm:$0xff]
    %v1877 = vld [vmem:[#allocation4 + $0x158] sm:$0xff]
    %v1878 = vld [vmem:[#allocation4 + $0x160] sm:$0xff]
    %v1879 = vld [vmem:[#allocation4 + $0x168] sm:$0xff]
    %v1880 = vld [vmem:[#allocation4 + $0x170] sm:$0xff]
    %v1881 = vld [vmem:[#allocation4 + $0x178] sm:$0xff]
    %v1882 = vld [vmem:[#allocation4 + $0x180] sm:$0xff]
    %v1883 = vld [vmem:[#allocation4 + $0x188] sm:$0xff]
    %v1884 = vld [vmem:[#allocation4 + $0x190] sm:$0xff]
    %v1885 = vld [vmem:[#allocation4 + $0x198] sm:$0xff]
    %v1886 = vld [vmem:[#allocation4 + $0x1a0] sm:$0xff]
    %v1887 = vld [vmem:[#allocation4 + $0x1a8] sm:$0xff]
    %v1888 = vld [vmem:[#allocation4 + $0x1b0] sm:$0xff]
    %v1889 = vld [vmem:[#allocation4 + $0x1b8] sm:$0xff]
    %v1890 = vld [vmem:[#allocation4 + $0x1c0] sm:$0xff]
    %v1891 = vld [vmem:[#allocation4 + $0x1c8] sm:$0xff]
    %v1892 = vld [vmem:[#allocation4 + $0x1d0] sm:$0xff]
    %v1893 = vld [vmem:[#allocation4 + $0x1d8] sm:$0xff]
    %v1894 = vld [vmem:[#allocation4 + $0x1e0] sm:$0xff]
    %v1895 = vld [vmem:[#allocation4 + $0x1e8] sm:$0xff]
    %v1896 = vld [vmem:[#allocation4 + $0x1f0] sm:$0xff]
    %v1897 = vld [vmem:[#allocation4 + $0x1f8] sm:$0xff]
    %v1898 = vld [vmem:[#allocation4 + $0x200] sm:$0xff]
    %v1899 = vld [vmem:[#allocation4 + $0x208] sm:$0xff]
    %v1900 = vld [vmem:[#allocation4 + $0x210] sm:$0xff]
    %v1901 = vld [vmem:[#allocation4 + $0x218] sm:$0xff]
    %v1902 = vld [vmem:[#allocation4 + $0x220] sm:$0xff]
    %v1903 = vld [vmem:[#allocation4 + $0x228] sm:$0xff]
    %v1904 = vld [vmem:[#allocation4 + $0x230] sm:$0xff]
    %v1905 = vld [vmem:[#allocation4 + $0x238] sm:$0xff]
    %v1906 = vld [vmem:[#allocation4 + $0x240] sm:$0xff]
    %v1907 = vld [vmem:[#allocation4 + $0x248] sm:$0xff]
    %v1908 = vld [vmem:[#allocation4 + $0x250] sm:$0xff]
    %v1909 = vld [vmem:[#allocation4 + $0x258] sm:$0xff]
    %v1910 = vld [vmem:[#allocation4 + $0x260] sm:$0xff]
    %v1911 = vld [vmem:[#allocation4 + $0x268] sm:$0xff]
    %v1912 = vld [vmem:[#allocation4 + $0x270] sm:$0xff]
    %v1913 = vld [vmem:[#allocation4 + $0x278] sm:$0xff]
    %v1914 = vld [vmem:[#allocation4 + $0x280] sm:$0xff]
    %v1915 = vld [vmem:[#allocation4 + $0x288] sm:$0xff]
    %v1916 = vld [vmem:[#allocation4 + $0x290] sm:$0xff]
    %v1917 = vld [vmem:[#allocation4 + $0x298] sm:$0xff]
    %v1918 = vld [vmem:[#allocation4 + $0x2a0] sm:$0xff]
    %v1919 = vld [vmem:[#allocation4 + $0x2a8] sm:$0xff]
    %v1920 = vld [vmem:[#allocation4 + $0x2b0] sm:$0xff]
    %v1921 = vld [vmem:[#allocation4 + $0x2b8] sm:$0xff]
    %v1922 = vld [vmem:[#allocation4 + $0x2c0] sm:$0xff]
    %v1923 = vld [vmem:[#allocation4 + $0x2c8] sm:$0xff]
    %v1924 = vld [vmem:[#allocation4 + $0x2d0] sm:$0xff]
    %v1925 = vld [vmem:[#allocation4 + $0x2d8] sm:$0xff]
    %v1926 = vld [vmem:[#allocation4 + $0x2e0] sm:$0xff]
    %v1927 = vld [vmem:[#allocation4 + $0x2e8] sm:$0xff]
    %v1928 = vld [vmem:[#allocation4 + $0x2f0] sm:$0xff]
    %v1929 = vld [vmem:[#allocation4 + $0x2f8] sm:$0xff]
    %v1930 = vld [vmem:[#allocation4 + $0x300] sm:$0xff]
    %v1931 = vld [vmem:[#allocation4 + $0x308] sm:$0xff]
    %v1932 = vld [vmem:[#allocation4 + $0x310] sm:$0xff]
    %v1933 = vld [vmem:[#allocation4 + $0x318] sm:$0xff]
    %v1934 = vld [vmem:[#allocation4 + $0x320] sm:$0xff]
    %v1935 = vld [vmem:[#allocation4 + $0x328] sm:$0xff]
    %v1936 = vld [vmem:[#allocation4 + $0x330] sm:$0xff]
    %v1937 = vld [vmem:[#allocation4 + $0x338] sm:$0xff]
    %v1938 = vld [vmem:[#allocation4 + $0x340] sm:$0xff]
    %v1939 = vld [vmem:[#allocation4 + $0x348] sm:$0xff]
    %v1940 = vld [vmem:[#allocation4 + $0x350] sm:$0xff]
    %v1941 = vld [vmem:[#allocation4 + $0x358] sm:$0xff]
    %v1942 = vld [vmem:[#allocation4 + $0x360] sm:$0xff]
    %v1943 = vld [vmem:[#allocation4 + $0x368] sm:$0xff]
    %v1944 = vld [vmem:[#allocation4 + $0x370] sm:$0xff]
    %v1945 = vld [vmem:[#allocation4 + $0x378] sm:$0xff]
    %v1946 = vld [vmem:[#allocation4 + $0x380] sm:$0xff]
    %v1947 = vld [vmem:[#allocation4 + $0x388] sm:$0xff]
    %v1948 = vld [vmem:[#allocation4 + $0x390] sm:$0xff]
    %v1949 = vld [vmem:[#allocation4 + $0x398] sm:$0xff]
    %v1950 = vld [vmem:[#allocation4 + $0x3a0] sm:$0xff]
    %v1951 = vld [vmem:[#allocation4 + $0x3a8] sm:$0xff]
    %v1952 = vld [vmem:[#allocation4 + $0x3b0] sm:$0xff]
    %v1953 = vld [vmem:[#allocation4 + $0x3b8] sm:$0xff]
    %v1954 = vld [vmem:[#allocation4 + $0x3c0] sm:$0xff]
    %v1955 = vld [vmem:[#allocation4 + $0x3c8] sm:$0xff]
    %v1956 = vld [vmem:[#allocation4 + $0x3d0] sm:$0xff]
    %v1957 = vld [vmem:[#allocation4 + $0x3d8] sm:$0xff]
    %v1958 = vld [vmem:[#allocation4 + $0x3e0] sm:$0xff]
    %v1959 = vld [vmem:[#allocation4 + $0x3e8] sm:$0xff]
    %v1960 = vld [vmem:[#allocation4 + $0x3f0] sm:$0xff]
    %v1961 = vld [vmem:[#allocation4 + $0x3f8] sm:$0xff]
    %v1962 = vld [vmem:[%s4] sm:$0xf]
    %v1964 = vlaneseq
    %v1965 = vshrl.u32 %v1964, 7
    %v1966 = vsub.s32 0, %v1965
    %v1967 = vrot.slane %v1962, %v1966
    %v1968 = vlaneseq
    %v1969 = vshrl.u32 %v1968, 7
    %v1970 = vsub.s32 1, %v1969
    %v1971 = vrot.slane %v1962, %v1970
    %v1972 = vlaneseq
    %v1973 = vshrl.u32 %v1972, 7
    %v1974 = vsub.s32 2, %v1973
    %v1975 = vrot.slane %v1962, %v1974
    %v1976 = vlaneseq
    %v1977 = vshrl.u32 %v1976, 7
    %v1978 = vsub.s32 3, %v1977
    %v1979 = vrot.slane %v1962, %v1978
    %v2112 = vunpack.c.l.b16 %v1834
    %v2113 = vunpack.c.h.b16 %v1834
    %v2114 = vunpack.c.l.b16 %v1835
    %v2115 = vunpack.c.h.b16 %v1835
    %v2116 = vunpack.c.l.b16 %v1836
    %v2117 = vunpack.c.h.b16 %v1836
    %v2118 = vunpack.c.l.b16 %v1837
    %v2119 = vunpack.c.h.b16 %v1837
    %v2120 = vunpack.c.l.b16 %v1838
    %v2121 = vunpack.c.h.b16 %v1838
    %v2122 = vunpack.c.l.b16 %v1839
    %v2123 = vunpack.c.h.b16 %v1839
    %v2124 = vunpack.c.l.b16 %v1840
    %v2125 = vunpack.c.h.b16 %v1840
    %v2126 = vunpack.c.l.b16 %v1841
    %v2127 = vunpack.c.h.b16 %v1841
    %v2128 = vunpack.c.l.b16 %v1842
    %v2129 = vunpack.c.h.b16 %v1842
    %v2130 = vunpack.c.l.b16 %v1843
    %v2131 = vunpack.c.h.b16 %v1843
    %v2132 = vunpack.c.l.b16 %v1844
    %v2133 = vunpack.c.h.b16 %v1844
    %v2134 = vunpack.c.l.b16 %v1845
    %v2135 = vunpack.c.h.b16 %v1845
    %v2136 = vunpack.c.l.b16 %v1846
    %v2137 = vunpack.c.h.b16 %v1846
    %v2138 = vunpack.c.l.b16 %v1847
    %v2139 = vunpack.c.h.b16 %v1847
    %v2140 = vunpack.c.l.b16 %v1848
    %v2141 = vunpack.c.h.b16 %v1848
    %v2142 = vunpack.c.l.b16 %v1849
    %v2143 = vunpack.c.h.b16 %v1849
    %v2144 = vunpack.c.l.b16 %v1850
    %v2145 = vunpack.c.h.b16 %v1850
    %v2146 = vunpack.c.l.b16 %v1851
    %v2147 = vunpack.c.h.b16 %v1851
    %v2148 = vunpack.c.l.b16 %v1852
    %v2149 = vunpack.c.h.b16 %v1852
    %v2150 = vunpack.c.l.b16 %v1853
    %v2151 = vunpack.c.h.b16 %v1853
    %v2152 = vunpack.c.l.b16 %v1854
    %v2153 = vunpack.c.h.b16 %v1854
    %v2154 = vunpack.c.l.b16 %v1855
    %v2155 = vunpack.c.h.b16 %v1855
    %v2156 = vunpack.c.l.b16 %v1856
    %v2157 = vunpack.c.h.b16 %v1856
    %v2158 = vunpack.c.l.b16 %v1857
    %v2159 = vunpack.c.h.b16 %v1857
    %v2160 = vunpack.c.l.b16 %v1858
    %v2161 = vunpack.c.h.b16 %v1858
    %v2162 = vunpack.c.l.b16 %v1859
    %v2163 = vunpack.c.h.b16 %v1859
    %v2164 = vunpack.c.l.b16 %v1860
    %v2165 = vunpack.c.h.b16 %v1860
    %v2166 = vunpack.c.l.b16 %v1861
    %v2167 = vunpack.c.h.b16 %v1861
    %v2168 = vunpack.c.l.b16 %v1862
    %v2169 = vunpack.c.h.b16 %v1862
    %v2170 = vunpack.c.l.b16 %v1863
    %v2171 = vunpack.c.h.b16 %v1863
    %v2172 = vunpack.c.l.b16 %v1864
    %v2173 = vunpack.c.h.b16 %v1864
    %v2174 = vunpack.c.l.b16 %v1865
    %v2175 = vunpack.c.h.b16 %v1865
    %v2176 = vunpack.c.l.b16 %v1866
    %v2177 = vunpack.c.h.b16 %v1866
    %v2178 = vunpack.c.l.b16 %v1867
    %v2179 = vunpack.c.h.b16 %v1867
    %v2180 = vunpack.c.l.b16 %v1868
    %v2181 = vunpack.c.h.b16 %v1868
    %v2182 = vunpack.c.l.b16 %v1869
    %v2183 = vunpack.c.h.b16 %v1869
    %v2184 = vunpack.c.l.b16 %v1870
    %v2185 = vunpack.c.h.b16 %v1870
    %v2186 = vunpack.c.l.b16 %v1871
    %v2187 = vunpack.c.h.b16 %v1871
    %v2188 = vunpack.c.l.b16 %v1872
    %v2189 = vunpack.c.h.b16 %v1872
    %v2190 = vunpack.c.l.b16 %v1873
    %v2191 = vunpack.c.h.b16 %v1873
    %v2192 = vunpack.c.l.b16 %v1874
    %v2193 = vunpack.c.h.b16 %v1874
    %v2194 = vunpack.c.l.b16 %v1875
    %v2195 = vunpack.c.h.b16 %v1875
    %v2196 = vunpack.c.l.b16 %v1876
    %v2197 = vunpack.c.h.b16 %v1876
    %v2198 = vunpack.c.l.b16 %v1877
    %v2199 = vunpack.c.h.b16 %v1877
    %v2200 = vunpack.c.l.b16 %v1878
    %v2201 = vunpack.c.h.b16 %v1878
    %v2202 = vunpack.c.l.b16 %v1879
    %v2203 = vunpack.c.h.b16 %v1879
    %v2204 = vunpack.c.l.b16 %v1880
    %v2205 = vunpack.c.h.b16 %v1880
    %v2206 = vunpack.c.l.b16 %v1881
    %v2207 = vunpack.c.h.b16 %v1881
    %v2208 = vunpack.c.l.b16 %v1882
    %v2209 = vunpack.c.h.b16 %v1882
    %v2210 = vunpack.c.l.b16 %v1883
    %v2211 = vunpack.c.h.b16 %v1883
    %v2212 = vunpack.c.l.b16 %v1884
    %v2213 = vunpack.c.h.b16 %v1884
    %v2214 = vunpack.c.l.b16 %v1885
    %v2215 = vunpack.c.h.b16 %v1885
    %v2216 = vunpack.c.l.b16 %v1886
    %v2217 = vunpack.c.h.b16 %v1886
    %v2218 = vunpack.c.l.b16 %v1887
    %v2219 = vunpack.c.h.b16 %v1887
    %v2220 = vunpack.c.l.b16 %v1888
    %v2221 = vunpack.c.h.b16 %v1888
    %v2222 = vunpack.c.l.b16 %v1889
    %v2223 = vunpack.c.h.b16 %v1889
    %v2224 = vunpack.c.l.b16 %v1890
    %v2225 = vunpack.c.h.b16 %v1890
    %v2226 = vunpack.c.l.b16 %v1891
    %v2227 = vunpack.c.h.b16 %v1891
    %v2228 = vunpack.c.l.b16 %v1892
    %v2229 = vunpack.c.h.b16 %v1892
    %v2230 = vunpack.c.l.b16 %v1893
    %v2231 = vunpack.c.h.b16 %v1893
    %v2232 = vunpack.c.l.b16 %v1894
    %v2233 = vunpack.c.h.b16 %v1894
    %v2234 = vunpack.c.l.b16 %v1895
    %v2235 = vunpack.c.h.b16 %v1895
    %v2236 = vunpack.c.l.b16 %v1896
    %v2237 = vunpack.c.h.b16 %v1896
    %v2238 = vunpack.c.l.b16 %v1897
    %v2239 = vunpack.c.h.b16 %v1897
    %v2240 = vunpack.c.l.b16 %v1898
    %v2241 = vunpack.c.h.b16 %v1898
    %v2242 = vunpack.c.l.b16 %v1899
    %v2243 = vunpack.c.h.b16 %v1899
    %v2244 = vunpack.c.l.b16 %v1900
    %v2245 = vunpack.c.h.b16 %v1900
    %v2246 = vunpack.c.l.b16 %v1901
    %v2247 = vunpack.c.h.b16 %v1901
    %v2248 = vunpack.c.l.b16 %v1902
    %v2249 = vunpack.c.h.b16 %v1902
    %v2250 = vunpack.c.l.b16 %v1903
    %v2251 = vunpack.c.h.b16 %v1903
    %v2252 = vunpack.c.l.b16 %v1904
    %v2253 = vunpack.c.h.b16 %v1904
    %v2254 = vunpack.c.l.b16 %v1905
    %v2255 = vunpack.c.h.b16 %v1905
    %v2256 = vunpack.c.l.b16 %v1906
    %v2257 = vunpack.c.h.b16 %v1906
    %v2258 = vunpack.c.l.b16 %v1907
    %v2259 = vunpack.c.h.b16 %v1907
    %v2260 = vunpack.c.l.b16 %v1908
    %v2261 = vunpack.c.h.b16 %v1908
    %v2262 = vunpack.c.l.b16 %v1909
    %v2263 = vunpack.c.h.b16 %v1909
    %v2264 = vunpack.c.l.b16 %v1910
    %v2265 = vunpack.c.h.b16 %v1910
    %v2266 = vunpack.c.l.b16 %v1911
    %v2267 = vunpack.c.h.b16 %v1911
    %v2268 = vunpack.c.l.b16 %v1912
    %v2269 = vunpack.c.h.b16 %v1912
    %v2270 = vunpack.c.l.b16 %v1913
    %v2271 = vunpack.c.h.b16 %v1913
    %v2272 = vunpack.c.l.b16 %v1914
    %v2273 = vunpack.c.h.b16 %v1914
    %v2274 = vunpack.c.l.b16 %v1915
    %v2275 = vunpack.c.h.b16 %v1915
    %v2276 = vunpack.c.l.b16 %v1916
    %v2277 = vunpack.c.h.b16 %v1916
    %v2278 = vunpack.c.l.b16 %v1917
    %v2279 = vunpack.c.h.b16 %v1917
    %v2280 = vunpack.c.l.b16 %v1918
    %v2281 = vunpack.c.h.b16 %v1918
    %v2282 = vunpack.c.l.b16 %v1919
    %v2283 = vunpack.c.h.b16 %v1919
    %v2284 = vunpack.c.l.b16 %v1920
    %v2285 = vunpack.c.h.b16 %v1920
    %v2286 = vunpack.c.l.b16 %v1921
    %v2287 = vunpack.c.h.b16 %v1921
    %v2288 = vunpack.c.l.b16 %v1922
    %v2289 = vunpack.c.h.b16 %v1922
    %v2290 = vunpack.c.l.b16 %v1923
    %v2291 = vunpack.c.h.b16 %v1923
    %v2292 = vunpack.c.l.b16 %v1924
    %v2293 = vunpack.c.h.b16 %v1924
    %v2294 = vunpack.c.l.b16 %v1925
    %v2295 = vunpack.c.h.b16 %v1925
    %v2296 = vunpack.c.l.b16 %v1926
    %v2297 = vunpack.c.h.b16 %v1926
    %v2298 = vunpack.c.l.b16 %v1927
    %v2299 = vunpack.c.h.b16 %v1927
    %v2300 = vunpack.c.l.b16 %v1928
    %v2301 = vunpack.c.h.b16 %v1928
    %v2302 = vunpack.c.l.b16 %v1929
    %v2303 = vunpack.c.h.b16 %v1929
    %v2304 = vunpack.c.l.b16 %v1930
    %v2305 = vunpack.c.h.b16 %v1930
    %v2306 = vunpack.c.l.b16 %v1931
    %v2307 = vunpack.c.h.b16 %v1931
    %v2308 = vunpack.c.l.b16 %v1932
    %v2309 = vunpack.c.h.b16 %v1932
    %v2310 = vunpack.c.l.b16 %v1933
    %v2311 = vunpack.c.h.b16 %v1933
    %v2312 = vunpack.c.l.b16 %v1934
    %v2313 = vunpack.c.h.b16 %v1934
    %v2314 = vunpack.c.l.b16 %v1935
    %v2315 = vunpack.c.h.b16 %v1935
    %v2316 = vunpack.c.l.b16 %v1936
    %v2317 = vunpack.c.h.b16 %v1936
    %v2318 = vunpack.c.l.b16 %v1937
    %v2319 = vunpack.c.h.b16 %v1937
    %v2320 = vunpack.c.l.b16 %v1938
    %v2321 = vunpack.c.h.b16 %v1938
    %v2322 = vunpack.c.l.b16 %v1939
    %v2323 = vunpack.c.h.b16 %v1939
    %v2324 = vunpack.c.l.b16 %v1940
    %v2325 = vunpack.c.h.b16 %v1940
    %v2326 = vunpack.c.l.b16 %v1941
    %v2327 = vunpack.c.h.b16 %v1941
    %v2328 = vunpack.c.l.b16 %v1942
    %v2329 = vunpack.c.h.b16 %v1942
    %v2330 = vunpack.c.l.b16 %v1943
    %v2331 = vunpack.c.h.b16 %v1943
    %v2332 = vunpack.c.l.b16 %v1944
    %v2333 = vunpack.c.h.b16 %v1944
    %v2334 = vunpack.c.l.b16 %v1945
    %v2335 = vunpack.c.h.b16 %v1945
    %v2336 = vunpack.c.l.b16 %v1946
    %v2337 = vunpack.c.h.b16 %v1946
    %v2338 = vunpack.c.l.b16 %v1947
    %v2339 = vunpack.c.h.b16 %v1947
    %v2340 = vunpack.c.l.b16 %v1948
    %v2341 = vunpack.c.h.b16 %v1948
    %v2342 = vunpack.c.l.b16 %v1949
    %v2343 = vunpack.c.h.b16 %v1949
    %v2344 = vunpack.c.l.b16 %v1950
    %v2345 = vunpack.c.h.b16 %v1950
    %v2346 = vunpack.c.l.b16 %v1951
    %v2347 = vunpack.c.h.b16 %v1951
    %v2348 = vunpack.c.l.b16 %v1952
    %v2349 = vunpack.c.h.b16 %v1952
    %v2350 = vunpack.c.l.b16 %v1953
    %v2351 = vunpack.c.h.b16 %v1953
    %v2352 = vunpack.c.l.b16 %v1954
    %v2353 = vunpack.c.h.b16 %v1954
    %v2354 = vunpack.c.l.b16 %v1955
    %v2355 = vunpack.c.h.b16 %v1955
    %v2356 = vunpack.c.l.b16 %v1956
    %v2357 = vunpack.c.h.b16 %v1956
    %v2358 = vunpack.c.l.b16 %v1957
    %v2359 = vunpack.c.h.b16 %v1957
    %v2360 = vunpack.c.l.b16 %v1958
    %v2361 = vunpack.c.h.b16 %v1958
    %v2362 = vunpack.c.l.b16 %v1959
    %v2363 = vunpack.c.h.b16 %v1959
    %v2364 = vunpack.c.l.b16 %v1960
    %v2365 = vunpack.c.h.b16 %v1960
    %v2366 = vunpack.c.l.b16 %v1961
    %v2367 = vunpack.c.h.b16 %v1961
    %v2368 = vpack.c.b16 %v2116, %v2112
    %v2369 = vpack.c.b16 %v2117, %v2113
    %v2370 = vpack.c.b16 %v2118, %v2114
    %v2371 = vpack.c.b16 %v2119, %v2115
    %v2372 = vpack.c.b16 %v2124, %v2120
    %v2373 = vpack.c.b16 %v2125, %v2121
    %v2374 = vpack.c.b16 %v2126, %v2122
    %v2375 = vpack.c.b16 %v2127, %v2123
    %v2376 = vpack.c.b16 %v2132, %v2128
    %v2377 = vpack.c.b16 %v2133, %v2129
    %v2378 = vpack.c.b16 %v2134, %v2130
    %v2379 = vpack.c.b16 %v2135, %v2131
    %v2380 = vpack.c.b16 %v2140, %v2136
    %v2381 = vpack.c.b16 %v2141, %v2137
    %v2382 = vpack.c.b16 %v2142, %v2138
    %v2383 = vpack.c.b16 %v2143, %v2139
    %v2384 = vpack.c.b16 %v2148, %v2144
    %v2385 = vpack.c.b16 %v2149, %v2145
    %v2386 = vpack.c.b16 %v2150, %v2146
    %v2387 = vpack.c.b16 %v2151, %v2147
    %v2388 = vpack.c.b16 %v2156, %v2152
    %v2389 = vpack.c.b16 %v2157, %v2153
    %v2390 = vpack.c.b16 %v2158, %v2154
    %v2391 = vpack.c.b16 %v2159, %v2155
    %v2392 = vpack.c.b16 %v2164, %v2160
    %v2393 = vpack.c.b16 %v2165, %v2161
    %v2394 = vpack.c.b16 %v2166, %v2162
    %v2395 = vpack.c.b16 %v2167, %v2163
    %v2396 = vpack.c.b16 %v2172, %v2168
    %v2397 = vpack.c.b16 %v2173, %v2169
    %v2398 = vpack.c.b16 %v2174, %v2170
    %v2399 = vpack.c.b16 %v2175, %v2171
    %v2400 = vpack.c.b16 %v2180, %v2176
    %v2401 = vpack.c.b16 %v2181, %v2177
    %v2402 = vpack.c.b16 %v2182, %v2178
    %v2403 = vpack.c.b16 %v2183, %v2179
    %v2404 = vpack.c.b16 %v2188, %v2184
    %v2405 = vpack.c.b16 %v2189, %v2185
    %v2406 = vpack.c.b16 %v2190, %v2186
    %v2407 = vpack.c.b16 %v2191, %v2187
    %v2408 = vpack.c.b16 %v2196, %v2192
    %v2409 = vpack.c.b16 %v2197, %v2193
    %v2410 = vpack.c.b16 %v2198, %v2194
    %v2411 = vpack.c.b16 %v2199, %v2195
    %v2412 = vpack.c.b16 %v2204, %v2200
    %v2413 = vpack.c.b16 %v2205, %v2201
    %v2414 = vpack.c.b16 %v2206, %v2202
    %v2415 = vpack.c.b16 %v2207, %v2203
    %v2416 = vpack.c.b16 %v2212, %v2208
    %v2417 = vpack.c.b16 %v2213, %v2209
    %v2418 = vpack.c.b16 %v2214, %v2210
    %v2419 = vpack.c.b16 %v2215, %v2211
    %v2420 = vpack.c.b16 %v2220, %v2216
    %v2421 = vpack.c.b16 %v2221, %v2217
    %v2422 = vpack.c.b16 %v2222, %v2218
    %v2423 = vpack.c.b16 %v2223, %v2219
    %v2424 = vpack.c.b16 %v2228, %v2224
    %v2425 = vpack.c.b16 %v2229, %v2225
    %v2426 = vpack.c.b16 %v2230, %v2226
    %v2427 = vpack.c.b16 %v2231, %v2227
    %v2428 = vpack.c.b16 %v2236, %v2232
    %v2429 = vpack.c.b16 %v2237, %v2233
    %v2430 = vpack.c.b16 %v2238, %v2234
    %v2431 = vpack.c.b16 %v2239, %v2235
    %v2432 = vpack.c.b16 %v2244, %v2240
    %v2433 = vpack.c.b16 %v2245, %v2241
    %v2434 = vpack.c.b16 %v2246, %v2242
    %v2435 = vpack.c.b16 %v2247, %v2243
    %v2436 = vpack.c.b16 %v2252, %v2248
    %v2437 = vpack.c.b16 %v2253, %v2249
    %v2438 = vpack.c.b16 %v2254, %v2250
    %v2439 = vpack.c.b16 %v2255, %v2251
    %v2440 = vpack.c.b16 %v2260, %v2256
    %v2441 = vpack.c.b16 %v2261, %v2257
    %v2442 = vpack.c.b16 %v2262, %v2258
    %v2443 = vpack.c.b16 %v2263, %v2259
    %v2444 = vpack.c.b16 %v2268, %v2264
    %v2445 = vpack.c.b16 %v2269, %v2265
    %v2446 = vpack.c.b16 %v2270, %v2266
    %v2447 = vpack.c.b16 %v2271, %v2267
    %v2448 = vpack.c.b16 %v2276, %v2272
    %v2449 = vpack.c.b16 %v2277, %v2273
    %v2450 = vpack.c.b16 %v2278, %v2274
    %v2451 = vpack.c.b16 %v2279, %v2275
    %v2452 = vpack.c.b16 %v2284, %v2280
    %v2453 = vpack.c.b16 %v2285, %v2281
    %v2454 = vpack.c.b16 %v2286, %v2282
    %v2455 = vpack.c.b16 %v2287, %v2283
    %v2456 = vpack.c.b16 %v2292, %v2288
    %v2457 = vpack.c.b16 %v2293, %v2289
    %v2458 = vpack.c.b16 %v2294, %v2290
    %v2459 = vpack.c.b16 %v2295, %v2291
    %v2460 = vpack.c.b16 %v2300, %v2296
    %v2461 = vpack.c.b16 %v2301, %v2297
    %v2462 = vpack.c.b16 %v2302, %v2298
    %v2463 = vpack.c.b16 %v2303, %v2299
    %v2464 = vpack.c.b16 %v2308, %v2304
    %v2465 = vpack.c.b16 %v2309, %v2305
    %v2466 = vpack.c.b16 %v2310, %v2306
    %v2467 = vpack.c.b16 %v2311, %v2307
    %v2468 = vpack.c.b16 %v2316, %v2312
    %v2469 = vpack.c.b16 %v2317, %v2313
    %v2470 = vpack.c.b16 %v2318, %v2314
    %v2471 = vpack.c.b16 %v2319, %v2315
    %v2472 = vpack.c.b16 %v2324, %v2320
    %v2473 = vpack.c.b16 %v2325, %v2321
    %v2474 = vpack.c.b16 %v2326, %v2322
    %v2475 = vpack.c.b16 %v2327, %v2323
    %v2476 = vpack.c.b16 %v2332, %v2328
    %v2477 = vpack.c.b16 %v2333, %v2329
    %v2478 = vpack.c.b16 %v2334, %v2330
    %v2479 = vpack.c.b16 %v2335, %v2331
    %v2480 = vpack.c.b16 %v2340, %v2336
    %v2481 = vpack.c.b16 %v2341, %v2337
    %v2482 = vpack.c.b16 %v2342, %v2338
    %v2483 = vpack.c.b16 %v2343, %v2339
    %v2484 = vpack.c.b16 %v2348, %v2344
    %v2485 = vpack.c.b16 %v2349, %v2345
    %v2486 = vpack.c.b16 %v2350, %v2346
    %v2487 = vpack.c.b16 %v2351, %v2347
    %v2488 = vpack.c.b16 %v2356, %v2352
    %v2489 = vpack.c.b16 %v2357, %v2353
    %v2490 = vpack.c.b16 %v2358, %v2354
    %v2491 = vpack.c.b16 %v2359, %v2355
    %v2492 = vpack.c.b16 %v2364, %v2360
    %v2493 = vpack.c.b16 %v2365, %v2361
    %v2494 = vpack.c.b16 %v2366, %v2362
    %v2495 = vpack.c.b16 %v2367, %v2363
    %2624 = vmatprep.subr.bf16.mxu0 %v2369
    %2625 = vmatpush1.bf16.msra.mxu0 %v2368
    %2626 = vmatprep.subr.bf16.mxu0 %v2373
    %2627 = vmatpush1.bf16.msra.mxu0 %v2372
    %2628 = vmatprep.subr.bf16.mxu0 %v2377
    %2629 = vmatpush1.bf16.msra.mxu0 %v2376
    %2630 = vmatprep.subr.bf16.mxu0 %v2381
    %2631 = vmatpush1.bf16.msra.mxu0 %v2380
    %2632 = vmatprep.subr.bf16.mxu0 %v2385
    %2633 = vmatpush1.bf16.msra.mxu0 %v2384
    %2634 = vmatprep.subr.bf16.mxu0 %v2389
    %2635 = vmatpush1.bf16.msra.mxu0 %v2388
    %2636 = vmatprep.subr.bf16.mxu0 %v2393
    %2637 = vmatpush1.bf16.msra.mxu0 %v2392
    %2638 = vmatprep.subr.bf16.mxu0 %v2397
    %2639 = vmatpush1.bf16.msra.mxu0 %v2396
    %2640 = vmatprep.subr.bf16.mxu0 %v2401
    %2641 = vmatpush1.bf16.msra.mxu0 %v2400
    %2642 = vmatprep.subr.bf16.mxu0 %v2405
    %2643 = vmatpush1.bf16.msra.mxu0 %v2404
    %2644 = vmatprep.subr.bf16.mxu0 %v2409
    %2645 = vmatpush1.bf16.msra.mxu0 %v2408
    %2646 = vmatprep.subr.bf16.mxu0 %v2413
    %2647 = vmatpush1.bf16.msra.mxu0 %v2412
    %2648 = vmatprep.subr.bf16.mxu0 %v2417
    %2649 = vmatpush1.bf16.msra.mxu0 %v2416
    %2650 = vmatprep.subr.bf16.mxu0 %v2421
    %2651 = vmatpush1.bf16.msra.mxu0 %v2420
    %2652 = vmatprep.subr.bf16.mxu0 %v2425
    %2653 = vmatpush1.bf16.msra.mxu0 %v2424
    %2654 = vmatprep.subr.bf16.mxu0 %v2429
    %2655 = vmatpush1.bf16.msra.mxu0 %v2428
    %2656 = vmatprep.mubr.bf16.mxu0 %v1831
    %2657 = vmatmul.mubr.bf16.gmra.mrb[0].mxu0 %v1830
    %v2658 = vpop.f32.mrb[0].mxu0
    %v2659 = vadd.f32 %v1967, %v2658
    %v2660 = vpop.f32.mrb[0].mxu0
    %v2661 = vadd.f32 %v1971, %v2660
    %v2662 = vpop.f32.mrb[0].mxu0
    %v2663 = vadd.f32 %v1967, %v2662
    %v2664 = vpop.f32.mrb[0].mxu0
    %v2665 = vadd.f32 %v1971, %v2664
    %2666 = vdwg.mxu0
    %2667 = vmatprep.subr.bf16.mxu0 %v2433
    %2668 = vmatpush1.bf16.msra.mxu0 %v2432
    %2669 = vmatprep.subr.bf16.mxu0 %v2437
    %2670 = vmatpush1.bf16.msra.mxu0 %v2436
    %2671 = vmatprep.subr.bf16.mxu0 %v2441
    %2672 = vmatpush1.bf16.msra.mxu0 %v2440
    %2673 = vmatprep.subr.bf16.mxu0 %v2445
    %2674 = vmatpush1.bf16.msra.mxu0 %v2444
    %2675 = vmatprep.subr.bf16.mxu0 %v2449
    %2676 = vmatpush1.bf16.msra.mxu0 %v2448
    %2677 = vmatprep.subr.bf16.mxu0 %v2453
    %2678 = vmatpush1.bf16.msra.mxu0 %v2452
    %2679 = vmatprep.subr.bf16.mxu0 %v2457
    %2680 = vmatpush1.bf16.msra.mxu0 %v2456
    %2681 = vmatprep.subr.bf16.mxu0 %v2461
    %2682 = vmatpush1.bf16.msra.mxu0 %v2460
    %2683 = vmatprep.subr.bf16.mxu0 %v2465
    %2684 = vmatpush1.bf16.msra.mxu0 %v2464
    %2685 = vmatprep.subr.bf16.mxu0 %v2469
    %2686 = vmatpush1.bf16.msra.mxu0 %v2468
    %2687 = vmatprep.subr.bf16.mxu0 %v2473
    %2688 = vmatpush1.bf16.msra.mxu0 %v2472
    %2689 = vmatprep.subr.bf16.mxu0 %v2477
    %2690 = vmatpush1.bf16.msra.mxu0 %v2476
    %2691 = vmatprep.subr.bf16.mxu0 %v2481
    %2692 = vmatpush1.bf16.msra.mxu0 %v2480
    %2693 = vmatprep.subr.bf16.mxu0 %v2485
    %2694 = vmatpush1.bf16.msra.mxu0 %v2484
    %2695 = vmatprep.subr.bf16.mxu0 %v2489
    %2696 = vmatpush1.bf16.msra.mxu0 %v2488
    %2697 = vmatprep.subr.bf16.mxu0 %v2493
    %2698 = vmatpush1.bf16.msra.mxu0 %v2492
    %2699 = vmatprep.mubr.bf16.mxu0 %v1833
    %2700 = vmatmul.mubr.bf16.gmra.mrb[0].mxu0 %v1832
    %v2701 = vpop.f32.mrb[0].mxu0
    %v2702 = vadd.f32 %v2659, %v2701
    %v2703 = vpop.f32.mrb[0].mxu0
    %v2704 = vadd.f32 %v2661, %v2703
    %v2705 = vpop.f32.mrb[0].mxu0
    %v2706 = vadd.f32 %v2663, %v2705
    %v2707 = vpop.f32.mrb[0].mxu0
    %v2708 = vadd.f32 %v2665, %v2707
    %2709 = vdwg.mxu0
    %2710 = vmatprep.subr.bf16.mxu0 %v2371
    %2711 = vmatpush1.bf16.msra.mxu0 %v2370
    %2712 = vmatprep.subr.bf16.mxu0 %v2375
    %2713 = vmatpush1.bf16.msra.mxu0 %v2374
    %2714 = vmatprep.subr.bf16.mxu0 %v2379
    %2715 = vmatpush1.bf16.msra.mxu0 %v2378
    %2716 = vmatprep.subr.bf16.mxu0 %v2383
    %2717 = vmatpush1.bf16.msra.mxu0 %v2382
    %2718 = vmatprep.subr.bf16.mxu0 %v2387
    %2719 = vmatpush1.bf16.msra.mxu0 %v2386
    %2720 = vmatprep.subr.bf16.mxu0 %v2391
    %2721 = vmatpush1.bf16.msra.mxu0 %v2390
    %2722 = vmatprep.subr.bf16.mxu0 %v2395
    %2723 = vmatpush1.bf16.msra.mxu0 %v2394
    %2724 = vmatprep.subr.bf16.mxu0 %v2399
    %2725 = vmatpush1.bf16.msra.mxu0 %v2398
    %2726 = vmatprep.subr.bf16.mxu0 %v2403
    %2727 = vmatpush1.bf16.msra.mxu0 %v2402
    %2728 = vmatprep.subr.bf16.mxu0 %v2407
    %2729 = vmatpush1.bf16.msra.mxu0 %v2406
    %2730 = vmatprep.subr.bf16.mxu0 %v2411
    %2731 = vmatpush1.bf16.msra.mxu0 %v2410
    %2732 = vmatprep.subr.bf16.mxu0 %v2415
    %2733 = vmatpush1.bf16.msra.mxu0 %v2414
    %2734 = vmatprep.subr.bf16.mxu0 %v2419
    %2735 = vmatpush1.bf16.msra.mxu0 %v2418
    %2736 = vmatprep.subr.bf16.mxu0 %v2423
    %2737 = vmatpush1.bf16.msra.mxu0 %v2422
    %2738 = vmatprep.subr.bf16.mxu0 %v2427
    %2739 = vmatpush1.bf16.msra.mxu0 %v2426
    %2740 = vmatprep.subr.bf16.mxu0 %v2431
    %2741 = vmatpush1.bf16.msra.mxu0 %v2430
    %2742 = vmatprep.mubr.bf16.mxu0 %v1831
    %2743 = vmatmul.mubr.bf16.gmra.mrb[0].mxu0 %v1830
    %v2744 = vpop.f32.mrb[0].mxu0
    %v2745 = vadd.f32 %v1975, %v2744
    %v2746 = vpop.f32.mrb[0].mxu0
    %v2747 = vadd.f32 %v1979, %v2746
    %v2748 = vpop.f32.mrb[0].mxu0
    %v2749 = vadd.f32 %v1975, %v2748
    %v2750 = vpop.f32.mrb[0].mxu0
    %v2751 = vadd.f32 %v1979, %v2750
    %2752 = vdwg.mxu0
    %2753 = vmatprep.subr.bf16.mxu0 %v2435
    %2754 = vmatpush1.bf16.msra.mxu0 %v2434
    %2755 = vmatprep.subr.bf16.mxu0 %v2439
    %2756 = vmatpush1.bf16.msra.mxu0 %v2438
    %2757 = vmatprep.subr.bf16.mxu0 %v2443
    %2758 = vmatpush1.bf16.msra.mxu0 %v2442
    %2759 = vmatprep.subr.bf16.mxu0 %v2447
    %2760 = vmatpush1.bf16.msra.mxu0 %v2446
    %2761 = vmatprep.subr.bf16.mxu0 %v2451
    %2762 = vmatpush1.bf16.msra.mxu0 %v2450
    %2763 = vmatprep.subr.bf16.mxu0 %v2455
    %2764 = vmatpush1.bf16.msra.mxu0 %v2454
    %2765 = vmatprep.subr.bf16.mxu0 %v2459
    %2766 = vmatpush1.bf16.msra.mxu0 %v2458
    %2767 = vmatprep.subr.bf16.mxu0 %v2463
    %2768 = vmatpush1.bf16.msra.mxu0 %v2462
    %2769 = vmatprep.subr.bf16.mxu0 %v2467
    %2770 = vmatpush1.bf16.msra.mxu0 %v2466
    %2771 = vmatprep.subr.bf16.mxu0 %v2471
    %2772 = vmatpush1.bf16.msra.mxu0 %v2470
    %2773 = vmatprep.subr.bf16.mxu0 %v2475
    %2774 = vmatpush1.bf16.msra.mxu0 %v2474
    %2775 = vmatprep.subr.bf16.mxu0 %v2479
    %2776 = vmatpush1.bf16.msra.mxu0 %v2478
    %2777 = vmatprep.subr.bf16.mxu0 %v2483
    %2778 = vmatpush1.bf16.msra.mxu0 %v2482
    %2779 = vmatprep.subr.bf16.mxu0 %v2487
    %2780 = vmatpush1.bf16.msra.mxu0 %v2486
    %2781 = vmatprep.subr.bf16.mxu0 %v2491
    %2782 = vmatpush1.bf16.msra.mxu0 %v2490
    %2783 = vmatprep.subr.bf16.mxu0 %v2495
    %2784 = vmatpush1.bf16.msra.mxu0 %v2494
    %2785 = vmatprep.mubr.bf16.mxu0 %v1833
    %2786 = vmatmul.mubr.bf16.gmra.mrb[0].mxu0 %v1832
    %v2787 = vpop.f32.mrb[0].mxu0
    %v2788 = vadd.f32 %v2745, %v2787
    %v2789 = vpop.f32.mrb[0].mxu0
    %v2790 = vadd.f32 %v2747, %v2789
    %v2791 = vpop.f32.mrb[0].mxu0
    %v2792 = vadd.f32 %v2749, %v2791
    %v2793 = vpop.f32.mrb[0].mxu0
    %v2794 = vadd.f32 %v2751, %v2793
    %2795 = vdwg.mxu0
    %v2796 = vmax.f32 %v2702, 0.0
    %v2797 = vmax.f32 %v2704, 0.0
    %v2798 = vmax.f32 %v2788, 0.0
    %v2799 = vmax.f32 %v2790, 0.0
    %v2800 = vmax.f32 %v2706, 0.0
    %v2801 = vmax.f32 %v2708, 0.0
    %v2802 = vmax.f32 %v2792, 0.0
    %v2803 = vmax.f32 %v2794, 0.0
    %v2804 = vpack.c.bf16 %v2800, %v2796
    %v2805 = vpack.c.bf16 %v2801, %v2797
    %v2806 = vpack.c.bf16 %v2802, %v2798
    %v2807 = vpack.c.bf16 %v2803, %v2799
    %v2808 = vld [vmem:[#allocation6] sm:$0xf]
    %v2809 = vld [vmem:[#allocation6 + $0x4] sm:$0xf]
    %v2810 = vld [vmem:[#allocation6 + $0x8] sm:$0xf]
    %v2811 = vld [vmem:[#allocation6 + $0xc] sm:$0xf]
    %v2812 = vld [vmem:[#allocation6 + $0x10] sm:$0xf]
    %v2813 = vld [vmem:[#allocation6 + $0x14] sm:$0xf]
    %v2814 = vld [vmem:[#allocation6 + $0x18] sm:$0xf]
    %v2815 = vld [vmem:[#allocation6 + $0x1c] sm:$0xf]
    %v2816 = vld [vmem:[#allocation6 + $0x20] sm:$0xf]
    %v2817 = vld [vmem:[#allocation6 + $0x24] sm:$0xf]
    %v2818 = vld [vmem:[#allocation6 + $0x28] sm:$0xf]
    %v2819 = vld [vmem:[#allocation6 + $0x2c] sm:$0xf]
    %v2820 = vld [vmem:[#allocation6 + $0x30] sm:$0xf]
    %v2821 = vld [vmem:[#allocation6 + $0x34] sm:$0xf]
    %v2822 = vld [vmem:[#allocation6 + $0x38] sm:$0xf]
    %v2823 = vld [vmem:[#allocation6 + $0x3c] sm:$0xf]
    %v2824 = vld [vmem:[#allocation6 + $0x40] sm:$0xf]
    %v2825 = vld [vmem:[#allocation6 + $0x44] sm:$0xf]
    %v2826 = vld [vmem:[#allocation6 + $0x48] sm:$0xf]
    %v2827 = vld [vmem:[#allocation6 + $0x4c] sm:$0xf]
    %v2828 = vld [vmem:[#allocation6 + $0x50] sm:$0xf]
    %v2829 = vld [vmem:[#allocation6 + $0x54] sm:$0xf]
    %v2830 = vld [vmem:[#allocation6 + $0x58] sm:$0xf]
    %v2831 = vld [vmem:[#allocation6 + $0x5c] sm:$0xf]
    %v2832 = vld [vmem:[#allocation6 + $0x60] sm:$0xf]
    %v2833 = vld [vmem:[#allocation6 + $0x64] sm:$0xf]
    %v2834 = vld [vmem:[#allocation6 + $0x68] sm:$0xf]
    %v2835 = vld [vmem:[#allocation6 + $0x6c] sm:$0xf]
    %v2836 = vld [vmem:[#allocation6 + $0x70] sm:$0xf]
    %v2837 = vld [vmem:[#allocation6 + $0x74] sm:$0xf]
    %v2838 = vld [vmem:[#allocation6 + $0x78] sm:$0xf]
    %v2839 = vld [vmem:[#allocation6 + $0x7c] sm:$0xf]
    %v2840 = vld [vmem:[#allocation6 + $0x80] sm:$0xf]
    %v2841 = vld [vmem:[#allocation6 + $0x84] sm:$0xf]
    %v2842 = vld [vmem:[#allocation6 + $0x88] sm:$0xf]
    %v2843 = vld [vmem:[#allocation6 + $0x8c] sm:$0xf]
    %v2844 = vld [vmem:[#allocation6 + $0x90] sm:$0xf]
    %v2845 = vld [vmem:[#allocation6 + $0x94] sm:$0xf]
    %v2846 = vld [vmem:[#allocation6 + $0x98] sm:$0xf]
    %v2847 = vld [vmem:[#allocation6 + $0x9c] sm:$0xf]
    %v2848 = vld [vmem:[#allocation6 + $0xa0] sm:$0xf]
    %v2849 = vld [vmem:[#allocation6 + $0xa4] sm:$0xf]
    %v2850 = vld [vmem:[#allocation6 + $0xa8] sm:$0xf]
    %v2851 = vld [vmem:[#allocation6 + $0xac] sm:$0xf]
    %v2852 = vld [vmem:[#allocation6 + $0xb0] sm:$0xf]
    %v2853 = vld [vmem:[#allocation6 + $0xb4] sm:$0xf]
    %v2854 = vld [vmem:[#allocation6 + $0xb8] sm:$0xf]
    %v2855 = vld [vmem:[#allocation6 + $0xbc] sm:$0xf]
    %v2856 = vld [vmem:[#allocation6 + $0xc0] sm:$0xf]
    %v2857 = vld [vmem:[#allocation6 + $0xc4] sm:$0xf]
    %v2858 = vld [vmem:[#allocation6 + $0xc8] sm:$0xf]
    %v2859 = vld [vmem:[#allocation6 + $0xcc] sm:$0xf]
    %v2860 = vld [vmem:[#allocation6 + $0xd0] sm:$0xf]
    %v2861 = vld [vmem:[#allocation6 + $0xd4] sm:$0xf]
    %v2862 = vld [vmem:[#allocation6 + $0xd8] sm:$0xf]
    %v2863 = vld [vmem:[#allocation6 + $0xdc] sm:$0xf]
    %v2864 = vld [vmem:[#allocation6 + $0xe0] sm:$0xf]
    %v2865 = vld [vmem:[#allocation6 + $0xe4] sm:$0xf]
    %v2866 = vld [vmem:[#allocation6 + $0xe8] sm:$0xf]
    %v2867 = vld [vmem:[#allocation6 + $0xec] sm:$0xf]
    %v2868 = vld [vmem:[#allocation6 + $0xf0] sm:$0xf]
    %v2869 = vld [vmem:[#allocation6 + $0xf4] sm:$0xf]
    %v2870 = vld [vmem:[#allocation6 + $0xf8] sm:$0xf]
    %v2871 = vld [vmem:[#allocation6 + $0xfc] sm:$0xf]
    %v2872 = vld [vmem:[%s6] sm:$0x1]
    %v2874 = vlaneseq
    %v2875 = vshrl.u32 %v2874, 7
    %v2876 = vsub.s32 0, %v2875
    %v2877 = vrot.slane %v2872, %v2876
    %v2943 = vunpack.c.l.b16 %v2808
    %v2944 = vunpack.c.l.b16 %v2809
    %v2945 = vunpack.c.l.b16 %v2810
    %v2946 = vunpack.c.l.b16 %v2811
    %v2947 = vunpack.c.l.b16 %v2812
    %v2948 = vunpack.c.l.b16 %v2813
    %v2949 = vunpack.c.l.b16 %v2814
    %v2950 = vunpack.c.l.b16 %v2815
    %v2951 = vunpack.c.l.b16 %v2816
    %v2952 = vunpack.c.l.b16 %v2817
    %v2953 = vunpack.c.l.b16 %v2818
    %v2954 = vunpack.c.l.b16 %v2819
    %v2955 = vunpack.c.l.b16 %v2820
    %v2956 = vunpack.c.l.b16 %v2821
    %v2957 = vunpack.c.l.b16 %v2822
    %v2958 = vunpack.c.l.b16 %v2823
    %v2959 = vunpack.c.l.b16 %v2824
    %v2960 = vunpack.c.l.b16 %v2825
    %v2961 = vunpack.c.l.b16 %v2826
    %v2962 = vunpack.c.l.b16 %v2827
    %v2963 = vunpack.c.l.b16 %v2828
    %v2964 = vunpack.c.l.b16 %v2829
    %v2965 = vunpack.c.l.b16 %v2830
    %v2966 = vunpack.c.l.b16 %v2831
    %v2967 = vunpack.c.l.b16 %v2832
    %v2968 = vunpack.c.l.b16 %v2833
    %v2969 = vunpack.c.l.b16 %v2834
    %v2970 = vunpack.c.l.b16 %v2835
    %v2971 = vunpack.c.l.b16 %v2836
    %v2972 = vunpack.c.l.b16 %v2837
    %v2973 = vunpack.c.l.b16 %v2838
    %v2974 = vunpack.c.l.b16 %v2839
    %v2975 = vunpack.c.l.b16 %v2840
    %v2976 = vunpack.c.l.b16 %v2841
    %v2977 = vunpack.c.l.b16 %v2842
    %v2978 = vunpack.c.l.b16 %v2843
    %v2979 = vunpack.c.l.b16 %v2844
    %v2980 = vunpack.c.l.b16 %v2845
    %v2981 = vunpack.c.l.b16 %v2846
    %v2982 = vunpack.c.l.b16 %v2847
    %v2983 = vunpack.c.l.b16 %v2848
    %v2984 = vunpack.c.l.b16 %v2849
    %v2985 = vunpack.c.l.b16 %v2850
    %v2986 = vunpack.c.l.b16 %v2851
    %v2987 = vunpack.c.l.b16 %v2852
    %v2988 = vunpack.c.l.b16 %v2853
    %v2989 = vunpack.c.l.b16 %v2854
    %v2990 = vunpack.c.l.b16 %v2855
    %v2991 = vunpack.c.l.b16 %v2856
    %v2992 = vunpack.c.l.b16 %v2857
    %v2993 = vunpack.c.l.b16 %v2858
    %v2994 = vunpack.c.l.b16 %v2859
    %v2995 = vunpack.c.l.b16 %v2860
    %v2996 = vunpack.c.l.b16 %v2861
    %v2997 = vunpack.c.l.b16 %v2862
    %v2998 = vunpack.c.l.b16 %v2863
    %v2999 = vunpack.c.l.b16 %v2864
    %v3000 = vunpack.c.l.b16 %v2865
    %v3001 = vunpack.c.l.b16 %v2866
    %v3002 = vunpack.c.l.b16 %v2867
    %v3003 = vunpack.c.l.b16 %v2868
    %v3004 = vunpack.c.l.b16 %v2869
    %v3005 = vunpack.c.l.b16 %v2870
    %v3006 = vunpack.c.l.b16 %v2871
    %v3007 = vpack.c.b16 %v2944, %v2943
    %v3008 = vpack.c.b16 %v2946, %v2945
    %v3009 = vpack.c.b16 %v2948, %v2947
    %v3010 = vpack.c.b16 %v2950, %v2949
    %v3011 = vpack.c.b16 %v2952, %v2951
    %v3012 = vpack.c.b16 %v2954, %v2953
    %v3013 = vpack.c.b16 %v2956, %v2955
    %v3014 = vpack.c.b16 %v2958, %v2957
    %v3015 = vpack.c.b16 %v2960, %v2959
    %v3016 = vpack.c.b16 %v2962, %v2961
    %v3017 = vpack.c.b16 %v2964, %v2963
    %v3018 = vpack.c.b16 %v2966, %v2965
    %v3019 = vpack.c.b16 %v2968, %v2967
    %v3020 = vpack.c.b16 %v2970, %v2969
    %v3021 = vpack.c.b16 %v2972, %v2971
    %v3022 = vpack.c.b16 %v2974, %v2973
    %v3023 = vpack.c.b16 %v2976, %v2975
    %v3024 = vpack.c.b16 %v2978, %v2977
    %v3025 = vpack.c.b16 %v2980, %v2979
    %v3026 = vpack.c.b16 %v2982, %v2981
    %v3027 = vpack.c.b16 %v2984, %v2983
    %v3028 = vpack.c.b16 %v2986, %v2985
    %v3029 = vpack.c.b16 %v2988, %v2987
    %v3030 = vpack.c.b16 %v2990, %v2989
    %v3031 = vpack.c.b16 %v2992, %v2991
    %v3032 = vpack.c.b16 %v2994, %v2993
    %v3033 = vpack.c.b16 %v2996, %v2995
    %v3034 = vpack.c.b16 %v2998, %v2997
    %v3035 = vpack.c.b16 %v3000, %v2999
    %v3036 = vpack.c.b16 %v3002, %v3001
    %v3037 = vpack.c.b16 %v3004, %v3003
    %v3038 = vpack.c.b16 %v3006, %v3005
    %3071 = vmatprep.subr.bf16.mxu0 0
    %3072 = vmatpush1.bf16.msra.mxu0 %v3007
    %3073 = vmatprep.subr.bf16.mxu0 0
    %3074 = vmatpush1.bf16.msra.mxu0 %v3008
    %3075 = vmatprep.subr.bf16.mxu0 0
    %3076 = vmatpush1.bf16.msra.mxu0 %v3009
    %3077 = vmatprep.subr.bf16.mxu0 0
    %3078 = vmatpush1.bf16.msra.mxu0 %v3010
    %3079 = vmatprep.subr.bf16.mxu0 0
    %3080 = vmatpush1.bf16.msra.mxu0 %v3011
    %3081 = vmatprep.subr.bf16.mxu0 0
    %3082 = vmatpush1.bf16.msra.mxu0 %v3012
    %3083 = vmatprep.subr.bf16.mxu0 0
    %3084 = vmatpush1.bf16.msra.mxu0 %v3013
    %3085 = vmatprep.subr.bf16.mxu0 0
    %3086 = vmatpush1.bf16.msra.mxu0 %v3014
    %3087 = vmatprep.subr.bf16.mxu0 0
    %3088 = vmatpush1.bf16.msra.mxu0 %v3015
    %3089 = vmatprep.subr.bf16.mxu0 0
    %3090 = vmatpush1.bf16.msra.mxu0 %v3016
    %3091 = vmatprep.subr.bf16.mxu0 0
    %3092 = vmatpush1.bf16.msra.mxu0 %v3017
    %3093 = vmatprep.subr.bf16.mxu0 0
    %3094 = vmatpush1.bf16.msra.mxu0 %v3018
    %3095 = vmatprep.subr.bf16.mxu0 0
    %3096 = vmatpush1.bf16.msra.mxu0 %v3019
    %3097 = vmatprep.subr.bf16.mxu0 0
    %3098 = vmatpush1.bf16.msra.mxu0 %v3020
    %3099 = vmatprep.subr.bf16.mxu0 0
    %3100 = vmatpush1.bf16.msra.mxu0 %v3021
    %3101 = vmatprep.subr.bf16.mxu0 0
    %3102 = vmatpush1.bf16.msra.mxu0 %v3022
    %3103 = vmatprep.mubr.bf16.mxu0 %v2805
    %3104 = vmatmul.mubr.bf16.gmra.mrb[0].mxu0 %v2804
    %v3105 = vpop.f32.mrb[0].mxu0
    %v3106 = vadd.f32 %v2877, %v3105
    %v3107 = vpop.f32.mrb[0].mxu0
    %v3108 = vpop.f32.mrb[0].mxu0
    %v3109 = vadd.f32 %v2877, %v3108
    %v3110 = vpop.f32.mrb[0].mxu0
    %3111 = vdwg.mxu0
    %3112 = vmatprep.subr.bf16.mxu0 0
    %3113 = vmatpush1.bf16.msra.mxu0 %v3023
    %3114 = vmatprep.subr.bf16.mxu0 0
    %3115 = vmatpush1.bf16.msra.mxu0 %v3024
    %3116 = vmatprep.subr.bf16.mxu0 0
    %3117 = vmatpush1.bf16.msra.mxu0 %v3025
    %3118 = vmatprep.subr.bf16.mxu0 0
    %3119 = vmatpush1.bf16.msra.mxu0 %v3026
    %3120 = vmatprep.subr.bf16.mxu0 0
    %3121 = vmatpush1.bf16.msra.mxu0 %v3027
    %3122 = vmatprep.subr.bf16.mxu0 0
    %3123 = vmatpush1.bf16.msra.mxu0 %v3028
    %3124 = vmatprep.subr.bf16.mxu0 0
    %3125 = vmatpush1.bf16.msra.mxu0 %v3029
    %3126 = vmatprep.subr.bf16.mxu0 0
    %3127 = vmatpush1.bf16.msra.mxu0 %v3030
    %3128 = vmatprep.subr.bf16.mxu0 0
    %3129 = vmatpush1.bf16.msra.mxu0 %v3031
    %3130 = vmatprep.subr.bf16.mxu0 0
    %3131 = vmatpush1.bf16.msra.mxu0 %v3032
    %3132 = vmatprep.subr.bf16.mxu0 0
    %3133 = vmatpush1.bf16.msra.mxu0 %v3033
    %3134 = vmatprep.subr.bf16.mxu0 0
    %3135 = vmatpush1.bf16.msra.mxu0 %v3034
    %3136 = vmatprep.subr.bf16.mxu0 0
    %3137 = vmatpush1.bf16.msra.mxu0 %v3035
    %3138 = vmatprep.subr.bf16.mxu0 0
    %3139 = vmatpush1.bf16.msra.mxu0 %v3036
    %3140 = vmatprep.subr.bf16.mxu0 0
    %3141 = vmatpush1.bf16.msra.mxu0 %v3037
    %3142 = vmatprep.subr.bf16.mxu0 0
    %3143 = vmatpush1.bf16.msra.mxu0 %v3038
    %3144 = vmatprep.mubr.bf16.mxu0 %v2807
    %3145 = vmatmul.mubr.bf16.gmra.mrb[0].mxu0 %v2806
    %v3146 = vpop.f32.mrb[0].mxu0
    %v3147 = vadd.f32 %v3106, %v3146
    %v3148 = vpop.f32.mrb[0].mxu0
    %v3149 = vpop.f32.mrb[0].mxu0
    %v3150 = vadd.f32 %v3109, %v3149
    %v3151 = vpop.f32.mrb[0].mxu0
    %3152 = vdwg.mxu0
    %3153 = vst [vmem:[%s7] sm:$0xff] %v3147
    %3154 = vst [vmem:[%s7 + $0x8] sm:$0xff] %v3150
    // Predicated region
    $region42: #{neural_network_forward.1} parent=1 // pred_check
      _
    $region43: #{neural_network_forward.1} parent=1 // pred_check_branch
      %3156 = sbr.rel (0) target = $region45
    $region44: #{neural_network_forward.1} parent=1 // pred_region
      _
    $region45: #{neural_network_forward.1} parent=1 // pred_fallthru
      _
    // Predicated region
    $region46: #{neural_network_forward.1} parent=1 // pred_check
      _
    $region47: #{neural_network_forward.1} parent=1 // pred_check_branch
      %3158 = sbr.rel (0) target = $region49
    $region48: #{neural_network_forward.1} parent=1 // pred_region
      _
    $region49: #{neural_network_forward.1} parent=1 // pred_fallthru
      _
    %3159 = vsyncpa [#allocation3], 1
    %3160 = vsyncpa [#allocation5], 1

</llo_original>
